<compile_context>
chip_gen: v5e
topology: v5e:2x2
jax: 0.10.0
libtpu: 0.0.40
codegen_flags: <defaults>
</compile_context>

<pallas_src>
import functools

import jax
import jax.numpy as jnp
from jax.experimental import pallas as pl
from jax.experimental.pallas import tpu as pltpu


def _round_up(n, m):
    return (n + m - 1) // m * m


# ----------------------------------------------------------------------------
# Pallas kernel: both GRU directions, time chunked, fused 3-gate hidden matmul.
# grid = (2, C): axis 0 = direction ("parallel"), axis 1 = chunk ("arbitrary")
# ----------------------------------------------------------------------------
def _gru_kernel(maxlen_ref,                      # SMEM (1,) int32 (scalar prefetch)
                lens_ref,                        # (Bp, 1)       int32 lengths
                gx_ref,                          # (TC, Bp, 3Hp) bf16 (x-proj + bias)
                whh_ref,                         # (Hp, 3Hp)     bf16 fused W_hh
                bnh_ref,                         # (1, Hp)       f32  b_hh (n gate)
                y_ref,                           # out (TC, Bp, Hp) f32
                h_ref,                           # out (Bp, Hp)  f32 (resident carry)
                *, tc, n_chunks, hp):
    d = pl.program_id(0)      # 0 = forward, 1 = backward
    c = pl.program_id(1)      # chunk counter in processing order

    # Time-block this grid step covers (backward walks the chunks in reverse).
    tb = d * (n_chunks - 1 - c) + (1 - d) * c
    chunk_start = tb * tc

    # initial_state=None in CustomGRU.forward => zeros.
    @pl.when(c == 0)
    def _():
        h_ref[...] = jnp.zeros(h_ref.shape, h_ref.dtype)

    @pl.when(chunk_start >= maxlen_ref[0])
    def _():
        # Whole chunk is padding for every sequence: outputs are zero, hidden
        # state untouched -- skip all matmul / gate work.
        y_ref[...] = jnp.zeros(y_ref.shape, y_ref.dtype)

    @pl.when(chunk_start < maxlen_ref[0])
    def _():
        bp = h_ref.shape[0]
        # Loop-invariant hoists (JAX does not CSE broadcast_in_dim).
        whh = whh_ref[...]                                   # (Hp, 3Hp) bf16
        lens = lens_ref[...]                                 # (Bp, 1) int32
        bnh_b = jnp.broadcast_to(bnh_ref[...], (bp, hp))     # (Bp, Hp) f32

        def step(j, h):
            # Local index inside the chunk; the backward direction walks the
            # chunk back-to-front so global time decreases monotonically.
            l = d * (tc - 1 - j) + (1 - d) * j
            hb = h.astype(jnp.bfloat16)
            # One fused (Bp,Hp)@(Hp,3Hp) MXU matmul per step (single
            # push/pop chain, N >= 256 for the 2x256^2 MXUs).
            gh = jnp.dot(hb, whh, preferred_element_type=jnp.float32)
            gx = gx_ref[l].astype(jnp.float32)               # (Bp, 3Hp)
            # Gate slices at 128-aligned lane offsets (free); consume each
            # gate result immediately to limit the live vreg set.
            r = jax.nn.sigmoid(gx[:, 0 * hp:1 * hp] + gh[:, 0 * hp:1 * hp])
            n = jnp.tanh(gx[:, 2 * hp:3 * hp]
                         + r * (gh[:, 2 * hp:3 * hp] + bnh_b))
            z = jax.nn.sigmoid(gx[:, 1 * hp:2 * hp] + gh[:, 1 * hp:2 * hp])
            h_new = h + (1.0 - z) * (n - h)                  # == (1-z)*n + z*h
            m = (chunk_start + l) < lens                     # (Bp, 1) validity
            y_ref[l] = jnp.where(m, h_new, 0.0)              # padded steps -> 0
            return jnp.where(m, h_new, h)                    # padded keep old h

        h_ref[...] = jax.lax.fori_loop(0, tc, step, h_ref[...], unroll=True)


# ----------------------------------------------------------------------------
# One bidirectional GRU layer (both directions in a single pallas_call).
# ----------------------------------------------------------------------------
def gru_bidir_layer(x_pad, lens_col, max_len, layer_w, *, time_chunk):
    """x_pad: (Tp, Bp, I) f32, lens_col: (Bp, 1) int32, max_len: (1,) int32.
    layer_w: fused / per-direction stacked weights from _prepare_layer.
    Returns y: (2, Tp, Bp, Hp) f32 and h_final: (2, Bp, Hp) f32."""
    (wih_f, whh_f, bx_f, bnh) = layer_w
    Tp, Bp, _ = x_pad.shape
    Hp = whh_f.shape[1]
    TC = time_chunk
    C = Tp // TC

    # Hoisted input projection: one batched bf16 matmul over all timesteps,
    # both directions and all three gates (the MXU-friendly bulk of the
    # FLOPs).  Output stored in bf16: it is the dominant HBM stream into the
    # recurrence and is widened to f32 inside the kernel.
    xb = x_pad.astype(jnp.bfloat16)
    gx = jnp.einsum("tbi,dio->dtbo", xb, wih_f,
                    preferred_element_type=jnp.float32)
    gx = (gx + bx_f[:, None, :, :]).astype(jnp.bfloat16)   # (2, Tp, Bp, 3Hp)

    def tmap(d, c, _ml):         # direction- and chunk-dependent time block
        tb = d * (C - 1 - c) + (1 - d) * c
        return (d, tb, 0, 0)

    wmap = lambda d, c, _ml: (d, 0, 0)
    lmap = lambda d, c, _ml: (0, 0)

    kernel = functools.partial(_gru_kernel, tc=TC, n_chunks=C, hp=Hp)

    y, h_final = pl.pallas_call(
        kernel,
        out_shape=(jax.ShapeDtypeStruct((2, Tp, Bp, Hp), jnp.float32),
                   jax.ShapeDtypeStruct((2, Bp, Hp), jnp.float32)),
        grid_spec=pltpu.PrefetchScalarGridSpec(
            num_scalar_prefetch=1,
            grid=(2, C),
            in_specs=[
                pl.BlockSpec((Bp, 1), lmap),                  # lengths (tiny)
                pl.BlockSpec((None, TC, Bp, 3 * Hp), tmap),   # fused gx (bf16)
                pl.BlockSpec((None, Hp, 3 * Hp), wmap),       # fused W_hh (bf16)
                pl.BlockSpec((None, 1, Hp), wmap),            # b_hh_n
            ],
            out_specs=(
                pl.BlockSpec((None, TC, Bp, Hp), tmap),       # y
                pl.BlockSpec((None, Bp, Hp), wmap),           # resident h carry
            ),
        ),
        compiler_params=pltpu.CompilerParams(
            dimension_semantics=("parallel", "arbitrary")),
    )(max_len, lens_col, gx, whh_f, bnh)
    return y, h_final


# ----------------------------------------------------------------------------
# Parameter handling
# ----------------------------------------------------------------------------
def init_custom_gru_params(key, input_size, hidden_size, num_layers):
    """PyTorch-style uniform(-1/sqrt(H), 1/sqrt(H)) init; gate order [r,z,n].
    Per direction: wih (I,3H), whh (H,3H), bih (1,3H), bhh (1,3H)."""
    params = []
    H = hidden_size
    bound = 1.0 / float(H) ** 0.5
    I = input_size
    for _ in range(num_layers):
        layer = []
        for _ in range(2):                       # forward, backward
            key, k1, k2, k3, k4 = jax.random.split(key, 5)
            wih = jax.random.uniform(k1, (I, 3 * H), jnp.float32, -bound, bound)
            whh = jax.random.uniform(k2, (H, 3 * H), jnp.float32, -bound, bound)
            bih = jax.random.uniform(k3, (1, 3 * H), jnp.float32, -bound, bound)
            bhh = jax.random.uniform(k4, (1, 3 * H), jnp.float32, -bound, bound)
            layer.append((wih, whh, bih, bhh))
        params.append(layer)
        I = 2 * H                                # CONCAT feeds the next layer
    return params


def _prepare_direction(wih, whh, bih, bhh, H, Hp):
    """Fuse the three gates along N, pad hidden dims to Hp (lane alignment),
    pre-fold biases, cast weight matrices to bf16 (MXU native).
    NOTE: each gate block is zero-padded to Hp BEFORE concatenation, so the
    padded hidden columns of h provably stay zero through the recurrence."""
    def pad_cols(a):
        return jnp.pad(a, [(0, 0)] * (a.ndim - 1) + [(0, Hp - H)])

    def pad_hh(a):
        return jnp.pad(a, ((0, Hp - H), (0, Hp - H)))

    def gate(a, g):
        return a[..., g * H:(g + 1) * H]

    bf = jnp.bfloat16
    wih_f = jnp.concatenate([pad_cols(gate(wih, g)) for g in range(3)],
                            axis=-1).astype(bf)                  # (I, 3Hp)
    whh_f = jnp.concatenate([pad_hh(gate(whh, g)) for g in range(3)],
                            axis=-1).astype(bf)                  # (Hp, 3Hp)
    # x-side biases: r/z get b_ih + b_hh folded; n keeps only b_ih here
    # (its b_hh term is multiplied by r inside the recurrence).
    bx_f = jnp.concatenate([pad_cols(gate(bih, 0) + gate(bhh, 0)),
                            pad_cols(gate(bih, 1) + gate(bhh, 1)),
                            pad_cols(gate(bih, 2))], axis=-1)    # (1, 3Hp) f32
    bnh = pad_cols(gate(bhh, 2))                                 # (1, Hp)  f32
    return (wih_f, whh_f, bx_f, bnh)


def _prepare_layer(layer_params, H, Hp):
    fwd = _prepare_direction(*layer_params[0], H, Hp)
    bwd = _prepare_direction(*layer_params[1], H, Hp)
    return tuple(jnp.stack([f, b], axis=0) for f, b in zip(fwd, bwd))


# ----------------------------------------------------------------------------
# CustomGRU forward (bidirectional, BiRNNMode.CONCAT, eval mode: dropout=0)
# ----------------------------------------------------------------------------
def custom_gru_forward(x, lengths, params, *, time_chunk=16):
    """Matches CustomGRU.forward with bidirectional=True, mode=CONCAT,
    batch_first=False, initial_state=None, dropout=0 (eval).
    Returns (outputs:(T,B,2H), final_states:(2*num_layers,B,H))."""
    T, B, _ = x.shape
    H = params[0][0][1].shape[0]                  # whh is (H, 3H)
    Hp = _round_up(H, 128)                        # lane-dense hidden tiles
    Bp = _round_up(B, 8)                          # full sublanes
    TC = max(1, min(time_chunk, T))
    Tp = _round_up(T, TC)

    x_pad = jnp.pad(x.astype(jnp.float32), ((0, Tp - T), (0, Bp - B), (0, 0)))
    lens = jnp.pad(lengths.astype(jnp.int32), (0, Bp - B))
    lens_col = lens[:, None]                                    # (Bp, 1) int32
    max_len = jnp.max(lengths).astype(jnp.int32).reshape(1)

    outputs = x_pad
    finals = []
    for layer_params in params:
        layer_w = _prepare_layer(layer_params, H, Hp)
        # TODO(synk): AugmentedGRU source unavailable; the backward output is
        # re-aligned to original time order (standard bidirectional behavior).
        y, h_fin = gru_bidir_layer(outputs, lens_col, max_len, layer_w,
                                   time_chunk=TC)
        # CONCAT mode: [forward | backward] along the feature axis.
        outputs = jnp.concatenate([y[0, :, :, :H], y[1, :, :, :H]], axis=-1)
        finals.append(jnp.stack([h_fin[0, :B, :H], h_fin[1, :B, :H]], axis=0))
    # TODO(synk): decov_output / decov_hidden loss_extra terms default to []
    # in the module, so they are omitted; initial_state != None not supported.
    return outputs[:T, :B], jnp.concatenate(finals, axis=0)


# ----------------------------------------------------------------------------
# Pure-JAX reference (same bf16-matmul / bf16-gx / f32-gate numerics).
# ----------------------------------------------------------------------------
def _gru_layer_ref(x, lengths, wih, whh, bih, bhh, reverse):
    T, B, _ = x.shape
    H = whh.shape[0]
    bf = jnp.bfloat16
    g = lambda a, k: a[..., k * H:(k + 1) * H]

    gx = jnp.einsum("tbi,ig->tbg", x.astype(bf), wih.astype(bf),
                    preferred_element_type=jnp.float32)

    def bf_rt(a):                     # bf16 round-trip (gx is stored in bf16)
        return a.astype(bf).astype(jnp.float32)

    gxr = bf_rt(g(gx, 0) + (g(bih, 0) + g(bhh, 0))[0])
    gxz = bf_rt(g(gx, 1) + (g(bih, 1) + g(bhh, 1))[0])
    gxn = bf_rt(g(gx, 2) + g(bih, 2)[0])
    whr, whz, whn = (g(whh, k).astype(bf) for k in range(3))
    bnh = g(bhh, 2)[0]

    def step(h, inp):
        xr, xz, xn, t = inp
        hb = h.astype(bf)
        gr = jnp.dot(hb, whr, preferred_element_type=jnp.float32)
        gz = jnp.dot(hb, whz, preferred_element_type=jnp.float32)
        gn = jnp.dot(hb, whn, preferred_element_type=jnp.float32)
        r = jax.nn.sigmoid(xr + gr)
        z = jax.nn.sigmoid(xz + gz)
        n = jnp.tanh(xn + r * (gn + bnh))
        h_new = h + (1.0 - z) * (n - h)
        m = (t < lengths)[:, None]
        return jnp.where(m, h_new, h), jnp.where(m, h_new, 0.0)

    ts = jnp.arange(T)
    xs = (gxr, gxz, gxn, ts)
    if reverse:
        xs = tuple(a[::-1] for a in xs)
    hT, ys = jax.lax.scan(step, jnp.zeros((B, H), jnp.float32), xs)
    if reverse:
        ys = ys[::-1]
    return ys, hT


def custom_gru_ref(x, lengths, params):
    outputs = x
    finals = []
    for (pf, pb) in params:
        y_f, h_f = _gru_layer_ref(outputs, lengths, *pf, reverse=False)
        y_b, h_b = _gru_layer_ref(outputs, lengths, *pb, reverse=True)
        outputs = jnp.concatenate([y_f, y_b], axis=-1)
        finals.append(jnp.stack([h_f, h_b], axis=0))
    return outputs, jnp.concatenate(finals, axis=0)


if __name__ == "__main__":
    T, B = 8, 2
    INPUT_SIZE, HIDDEN_SIZE, NUM_LAYERS = 16, 32, 2

    key = jax.random.PRNGKey(0)
    kx, kp = jax.random.split(key)
    x = jax.random.normal(kx, (T, B, INPUT_SIZE), jnp.float32)  # (seq,batch,feat)
    params = init_custom_gru_params(kp, INPUT_SIZE, HIDDEN_SIZE, NUM_LAYERS)

    def run_case(length_list):
        lengths = jnp.asarray(length_list, jnp.int32)
        # Zero the padding like pad_packed_sequence would produce.
        t_idx = jnp.arange(T)[:, None, None]
        xi = jnp.where(t_idx < lengths[None, :, None], x, 0.0)

        out, h_fin = custom_gru_forward(xi, lengths, params, time_chunk=4)
        out = jax.block_until_ready(out)
        h_fin = jax.block_until_ready(h_fin)

        out_ref, h_ref = custom_gru_ref(xi, lengths, params)
        assert out.shape == (T, B, 2 * HIDDEN_SIZE)
        assert h_fin.shape == (2 * NUM_LAYERS, B, HIDDEN_SIZE)
        assert jnp.allclose(out, out_ref, atol=5e-3, rtol=5e-3), \
            float(jnp.max(jnp.abs(out - out_ref)))
        assert jnp.allclose(h_fin, h_ref, atol=5e-3, rtol=5e-3), \
            float(jnp.max(jnp.abs(h_fin - h_ref)))

    run_case([8, 6])   # normal lengths
    run_case([3, 2])   # short sequences: exercises the padded-chunk skip path
    print("KERNEL_OK")
</pallas_src>

<mosaic_0001>
module attributes {stable_mosaic.version = 11 : i64} {
  func.func @_gru_kernel(%arg0: i32, %arg1: i32, %arg2: memref<1xi32, #tpu.memory_space<smem>>, %arg3: memref<8x1xi32, #tpu.memory_space<vmem>>, %arg4: memref<1x4x8x384xbf16, #tpu.memory_space<vmem>>, %arg5: memref<1x128x384xbf16, #tpu.memory_space<vmem>>, %arg6: memref<1x1x128xf32, #tpu.memory_space<vmem>>, %arg7: memref<1x4x8x128xf32, #tpu.memory_space<vmem>>, %arg8: memref<1x8x128xf32, #tpu.memory_space<vmem>>) attributes {dimension_semantics = [#tpu.dimension_semantics<parallel>, #tpu.dimension_semantics<arbitrary>], iteration_bounds = array<i64: 2, 2>, scalar_prefetch = 1 : i64, scratch_operands = 0 : i64, tpu.core_type = #tpu.core_type<tc>, window_params = [{pipeline_mode = #tpu.pipeline_mode<synchronous>, transform_indices = @transform_0, window_bounds = array<i64: 8, 1>}, {transform_indices = @transform_1, window_bounds = array<i64: 1, 4, 8, 384>}, {transform_indices = @transform_2, window_bounds = array<i64: 1, 128, 384>}, {transform_indices = @transform_3, window_bounds = array<i64: 1, 1, 128>}, {transform_indices = @transform_4, window_bounds = array<i64: 1, 4, 8, 128>}, {transform_indices = @transform_5, window_bounds = array<i64: 1, 8, 128>}]} {
    %c1_i32 = arith.constant 1 : i32
    %0 = arith.subi %c1_i32, %arg1 : i32
    %1 = arith.muli %arg0, %0 : i32
    %c1_i32_0 = arith.constant 1 : i32
    %2 = arith.subi %c1_i32_0, %arg0 : i32
    %3 = arith.muli %2, %arg1 : i32
    %4 = arith.addi %1, %3 : i32
    %c4_i32 = arith.constant 4 : i32
    %5 = arith.muli %4, %c4_i32 : i32
    %c0_i32 = arith.constant 0 : i32
    %6 = arith.cmpi eq, %arg1, %c0_i32 : i32
    %7 = arith.extui %6 : i1 to i32
    %c0_i32_1 = arith.constant 0 : i32
    %8 = arith.cmpi ne, %7, %c0_i32_1 : i32
    scf.if %8 {
      %cst = arith.constant 0.000000e+00 : f32
      %17 = vector.broadcast %cst : f32 to vector<8x128xf32>
      %c0_5 = arith.constant 0 : index
      %c0_6 = arith.constant 0 : index
      %c0_7 = arith.constant 0 : index
      %18 = vector.load %arg8[%c0_5, %c0_6, %c0_7] : memref<1x8x128xf32, #tpu.memory_space<vmem>>, vector<1x8x128xf32>
      %19 = vector.shape_cast %18 : vector<1x8x128xf32> to vector<8x128xf32>
      %20 = vector.shape_cast %17 : vector<8x128xf32> to vector<1x8x128xf32>
      tpu.vector_store %arg8[%c0_5, %c0_6, %c0_7], %20 {strides = array<i32>} : memref<1x8x128xf32, #tpu.memory_space<vmem>>, vector<1x8x128xf32>,
    } else {
    }
    %c0 = arith.constant 0 : index
    %9 = memref.load %arg2[%c0] : memref<1xi32, #tpu.memory_space<smem>>
    %10 = arith.cmpi sge, %5, %9 : i32
    %11 = arith.extui %10 : i1 to i32
    %c0_i32_2 = arith.constant 0 : i32
    %12 = arith.cmpi ne, %11, %c0_i32_2 : i32
    scf.if %12 {
      %cst = arith.constant 0.000000e+00 : f32
      %17 = vector.broadcast %cst : f32 to vector<4x8x128xf32>
      %c0_5 = arith.constant 0 : index
      %c0_6 = arith.constant 0 : index
      %c0_7 = arith.constant 0 : index
      %c0_8 = arith.constant 0 : index
      %18 = vector.load %arg7[%c0_5, %c0_6, %c0_7, %c0_8] : memref<1x4x8x128xf32, #tpu.memory_space<vmem>>, vector<1x4x8x128xf32>
      %19 = vector.shape_cast %18 : vector<1x4x8x128xf32> to vector<4x8x128xf32>
      %20 = vector.shape_cast %17 : vector<4x8x128xf32> to vector<1x4x8x128xf32>
      tpu.vector_store %arg7[%c0_5, %c0_6, %c0_7, %c0_8], %20 {strides = array<i32>} : memref<1x4x8x128xf32, #tpu.memory_space<vmem>>, vector<1x4x8x128xf32>,
    } else {
    }
    %c0_3 = arith.constant 0 : index
    %13 = memref.load %arg2[%c0_3] : memref<1xi32, #tpu.memory_space<smem>>
    %14 = arith.cmpi slt, %5, %13 : i32
    %15 = arith.extui %14 : i1 to i32
    %c0_i32_4 = arith.constant 0 : i32
    %16 = arith.cmpi ne, %15, %c0_i32_4 : i32
    scf.if %16 {
      %c0_5 = arith.constant 0 : index
      %c0_6 = arith.constant 0 : index
      %c0_7 = arith.constant 0 : index
      %17 = vector.load %arg5[%c0_5, %c0_6, %c0_7] : memref<1x128x384xbf16, #tpu.memory_space<vmem>>, vector<1x128x384xbf16>
      %18 = vector.shape_cast %17 : vector<1x128x384xbf16> to vector<128x384xbf16>
      %c0_8 = arith.constant 0 : index
      %c0_9 = arith.constant 0 : index
      %19 = vector.load %arg3[%c0_8, %c0_9] : memref<8x1xi32, #tpu.memory_space<vmem>>, vector<8x1xi32>
      %c0_10 = arith.constant 0 : index
      %c0_11 = arith.constant 0 : index
      %c0_12 = arith.constant 0 : index
      %20 = vector.load %arg6[%c0_10, %c0_11, %c0_12] : memref<1x1x128xf32, #tpu.memory_space<vmem>>, vector<1x1x128xf32>
      %21 = vector.shape_cast %20 : vector<1x1x128xf32> to vector<1x128xf32>
      %22 = vector.shape_cast %21 : vector<1x128xf32> to vector<1x128xf32>
      %23 = vector.broadcast %22 : vector<1x128xf32> to vector<8x128xf32>
      %c0_13 = arith.constant 0 : index
      %c0_14 = arith.constant 0 : index
      %c0_15 = arith.constant 0 : index
      %24 = vector.load %arg8[%c0_13, %c0_14, %c0_15] : memref<1x8x128xf32, #tpu.memory_space<vmem>>, vector<1x8x128xf32>
      %25 = vector.shape_cast %24 : vector<1x8x128xf32> to vector<8x128xf32>
      %c0_i32_16 = arith.constant 0 : i32
      %c3_i32 = arith.constant 3 : i32
      %26 = arith.subi %c3_i32, %c0_i32_16 : i32
      %27 = arith.muli %arg0, %26 : i32
      %c1_i32_17 = arith.constant 1 : i32
      %28 = arith.subi %c1_i32_17, %arg0 : i32
      %29 = arith.muli %28, %c0_i32_16 : i32
      %30 = arith.addi %27, %29 : i32
      %31 = arith.truncf %25 : vector<8x128xf32> to vector<8x128xbf16>
      %cst = arith.constant dense<0.000000e+00> : vector<8x384xf32>
      %32 = tpu.matmul %31, %18, %cst {dimension_numbers = #tpu.dot_dimension_numbers<[1], [0], [0], [1], [0, 0, 1, 1], [], []>} : vector<8x128xbf16>, vector<128x384xbf16>, vector<8x384xf32> -> vector<8x384xf32>
      %c0_18 = arith.constant 0 : index
      %33 = arith.index_cast %30 : i32 to index
      %c0_19 = arith.constant 0 : index
      %c0_20 = arith.constant 0 : index
      %34 = vector.load %arg4[%c0_18, %33, %c0_19, %c0_20] : memref<1x4x8x384xbf16, #tpu.memory_space<vmem>>, vector<1x1x8x384xbf16>
      %35 = vector.shape_cast %34 : vector<1x1x8x384xbf16> to vector<8x384xbf16>
      %36 = arith.extf %35 : vector<8x384xbf16> to vector<8x384xf32>
      %37 = vector.extract_strided_slice %36 {offsets = [0, 0], sizes = [8, 128], strides = [1, 1]} : vector<8x384xf32> to vector<8x128xf32>
      %38 = vector.extract_strided_slice %32 {offsets = [0, 0], sizes = [8, 128], strides = [1, 1]} : vector<8x384xf32> to vector<8x128xf32>
      %39 = arith.addf %37, %38 : vector<8x128xf32>
      %40 = arith.negf %39 : vector<8x128xf32>
      %41 = math.exp %40 : vector<8x128xf32>
      %cst_21 = arith.constant 1.000000e+00 : f32
      %42 = vector.broadcast %cst_21 : f32 to vector<8x128xf32>
      %43 = arith.addf %42, %41 : vector<8x128xf32>
      %44 = arith.divf %42, %43 : vector<8x128xf32>
      %45 = vector.extract_strided_slice %36 {offsets = [0, 256], sizes = [8, 128], strides = [1, 1]} : vector<8x384xf32> to vector<8x128xf32>
      %46 = vector.extract_strided_slice %32 {offsets = [0, 256], sizes = [8, 128], strides = [1, 1]} : vector<8x384xf32> to vector<8x128xf32>
      %47 = arith.addf %46, %23 : vector<8x128xf32>
      %48 = arith.mulf %44, %47 : vector<8x128xf32>
      %49 = arith.addf %45, %48 : vector<8x128xf32>
      %50 = math.tanh %49 : vector<8x128xf32>
      %51 = vector.extract_strided_slice %36 {offsets = [0, 128], sizes = [8, 128], strides = [1, 1]} : vector<8x384xf32> to vector<8x128xf32>
      %52 = vector.extract_strided_slice %32 {offsets = [0, 128], sizes = [8, 128], strides = [1, 1]} : vector<8x384xf32> to vector<8x128xf32>
      %53 = arith.addf %51, %52 : vector<8x128xf32>
      %54 = arith.negf %53 : vector<8x128xf32>
      %55 = math.exp %54 : vector<8x128xf32>
      %cst_22 = arith.constant 1.000000e+00 : f32
      %56 = vector.broadcast %cst_22 : f32 to vector<8x128xf32>
      %57 = arith.addf %56, %55 : vector<8x128xf32>
      %58 = arith.divf %56, %57 : vector<8x128xf32>
      %cst_23 = arith.constant 1.000000e+00 : f32
      %59 = vector.broadcast %cst_23 : f32 to vector<8x128xf32>
      %60 = arith.subf %59, %58 : vector<8x128xf32>
      %61 = arith.subf %50, %25 : vector<8x128xf32>
      %62 = arith.mulf %60, %61 : vector<8x128xf32>
      %63 = arith.addf %25, %62 : vector<8x128xf32>
      %64 = arith.addi %5, %30 : i32
      %65 = vector.broadcast %64 : i32 to vector<8x1xi32>
      %66 = arith.cmpi slt, %65, %19 : vector<8x1xi32>
      %cst_24 = arith.constant 0.000000e+00 : f32
      %67 = vector.shape_cast %66 : vector<8x1xi1> to vector<8x1xi1>
      %68 = vector.broadcast %67 : vector<8x1xi1> to vector<8x128xi1>
      %69 = vector.broadcast %cst_24 : f32 to vector<8x128xf32>
      %70 = arith.select %68, %63, %69 : vector<8x128xi1>, vector<8x128xf32>
      %c0_25 = arith.constant 0 : index
      %71 = arith.index_cast %30 : i32 to index
      %c0_26 = arith.constant 0 : index
      %c0_27 = arith.constant 0 : index
      %72 = vector.load %arg7[%c0_25, %71, %c0_26, %c0_27] : memref<1x4x8x128xf32, #tpu.memory_space<vmem>>, vector<1x1x8x128xf32>
      %73 = vector.shape_cast %72 : vector<1x1x8x128xf32> to vector<8x128xf32>
      %74 = vector.shape_cast %70 : vector<8x128xf32> to vector<1x1x8x128xf32>
      tpu.vector_store %arg7[%c0_25, %71, %c0_26, %c0_27], %74 {strides = array<i32>} : memref<1x4x8x128xf32, #tpu.memory_space<vmem>>, vector<1x1x8x128xf32>,
      %75 = vector.shape_cast %66 : vector<8x1xi1> to vector<8x1xi1>
      %76 = vector.broadcast %75 : vector<8x1xi1> to vector<8x128xi1>
      %77 = arith.select %76, %63, %25 : vector<8x128xi1>, vector<8x128xf32>
      %c1_i32_28 = arith.constant 1 : i32
      %c3_i32_29 = arith.constant 3 : i32
      %78 = arith.subi %c3_i32_29, %c1_i32_28 : i32
      %79 = arith.muli %arg0, %78 : i32
      %c1_i32_30 = arith.constant 1 : i32
      %80 = arith.subi %c1_i32_30, %arg0 : i32
      %81 = arith.muli %80, %c1_i32_28 : i32
      %82 = arith.addi %79, %81 : i32
      %83 = arith.truncf %77 : vector<8x128xf32> to vector<8x128xbf16>
      %cst_31 = arith.constant dense<0.000000e+00> : vector<8x384xf32>
      %84 = tpu.matmul %83, %18, %cst_31 {dimension_numbers = #tpu.dot_dimension_numbers<[1], [0], [0], [1], [0, 0, 1, 1], [], []>} : vector<8x128xbf16>, vector<128x384xbf16>, vector<8x384xf32> -> vector<8x384xf32>
      %c0_32 = arith.constant 0 : index
      %85 = arith.index_cast %82 : i32 to index
      %c0_33 = arith.constant 0 : index
      %c0_34 = arith.constant 0 : index
      %86 = vector.load %arg4[%c0_32, %85, %c0_33, %c0_34] : memref<1x4x8x384xbf16, #tpu.memory_space<vmem>>, vector<1x1x8x384xbf16>
      %87 = vector.shape_cast %86 : vector<1x1x8x384xbf16> to vector<8x384xbf16>
      %88 = arith.extf %87 : vector<8x384xbf16> to vector<8x384xf32>
      %89 = vector.extract_strided_slice %88 {offsets = [0, 0], sizes = [8, 128], strides = [1, 1]} : vector<8x384xf32> to vector<8x128xf32>
      %90 = vector.extract_strided_slice %84 {offsets = [0, 0], sizes = [8, 128], strides = [1, 1]} : vector<8x384xf32> to vector<8x128xf32>
      %91 = arith.addf %89, %90 : vector<8x128xf32>
      %92 = arith.negf %91 : vector<8x128xf32>
      %93 = math.exp %92 : vector<8x128xf32>
      %cst_35 = arith.constant 1.000000e+00 : f32
      %94 = vector.broadcast %cst_35 : f32 to vector<8x128xf32>
      %95 = arith.addf %94, %93 : vector<8x128xf32>
      %96 = arith.divf %94, %95 : vector<8x128xf32>
      %97 = vector.extract_strided_slice %88 {offsets = [0, 256], sizes = [8, 128], strides = [1, 1]} : vector<8x384xf32> to vector<8x128xf32>
      %98 = vector.extract_strided_slice %84 {offsets = [0, 256], sizes = [8, 128], strides = [1, 1]} : vector<8x384xf32> to vector<8x128xf32>
      %99 = arith.addf %98, %23 : vector<8x128xf32>
      %100 = arith.mulf %96, %99 : vector<8x128xf32>
      %101 = arith.addf %97, %100 : vector<8x128xf32>
      %102 = math.tanh %101 : vector<8x128xf32>
      %103 = vector.extract_strided_slice %88 {offsets = [0, 128], sizes = [8, 128], strides = [1, 1]} : vector<8x384xf32> to vector<8x128xf32>
      %104 = vector.extract_strided_slice %84 {offsets = [0, 128], sizes = [8, 128], strides = [1, 1]} : vector<8x384xf32> to vector<8x128xf32>
      %105 = arith.addf %103, %104 : vector<8x128xf32>
      %106 = arith.negf %105 : vector<8x128xf32>
      %107 = math.exp %106 : vector<8x128xf32>
      %cst_36 = arith.constant 1.000000e+00 : f32
      %108 = vector.broadcast %cst_36 : f32 to vector<8x128xf32>
      %109 = arith.addf %108, %107 : vector<8x128xf32>
      %110 = arith.divf %108, %109 : vector<8x128xf32>
      %cst_37 = arith.constant 1.000000e+00 : f32
      %111 = vector.broadcast %cst_37 : f32 to vector<8x128xf32>
      %112 = arith.subf %111, %110 : vector<8x128xf32>
      %113 = arith.subf %102, %77 : vector<8x128xf32>
      %114 = arith.mulf %112, %113 : vector<8x128xf32>
      %115 = arith.addf %77, %114 : vector<8x128xf32>
      %116 = arith.addi %5, %82 : i32
      %117 = vector.broadcast %116 : i32 to vector<8x1xi32>
      %118 = arith.cmpi slt, %117, %19 : vector<8x1xi32>
      %cst_38 = arith.constant 0.000000e+00 : f32
      %119 = vector.shape_cast %118 : vector<8x1xi1> to vector<8x1xi1>
      %120 = vector.broadcast %119 : vector<8x1xi1> to vector<8x128xi1>
      %121 = vector.broadcast %cst_38 : f32 to vector<8x128xf32>
      %122 = arith.select %120, %115, %121 : vector<8x128xi1>, vector<8x128xf32>
      %c0_39 = arith.constant 0 : index
      %123 = arith.index_cast %82 : i32 to index
      %c0_40 = arith.constant 0 : index
      %c0_41 = arith.constant 0 : index
      %124 = vector.load %arg7[%c0_39, %123, %c0_40, %c0_41] : memref<1x4x8x128xf32, #tpu.memory_space<vmem>>, vector<1x1x8x128xf32>
      %125 = vector.shape_cast %124 : vector<1x1x8x128xf32> to vector<8x128xf32>
      %126 = vector.shape_cast %122 : vector<8x128xf32> to vector<1x1x8x128xf32>
      tpu.vector_store %arg7[%c0_39, %123, %c0_40, %c0_41], %126 {strides = array<i32>} : memref<1x4x8x128xf32, #tpu.memory_space<vmem>>, vector<1x1x8x128xf32>,
      %127 = vector.shape_cast %118 : vector<8x1xi1> to vector<8x1xi1>
      %128 = vector.broadcast %127 : vector<8x1xi1> to vector<8x128xi1>
      %129 = arith.select %128, %115, %77 : vector<8x128xi1>, vector<8x128xf32>
      %c2_i32 = arith.constant 2 : i32
      %c3_i32_42 = arith.constant 3 : i32
      %130 = arith.subi %c3_i32_42, %c2_i32 : i32
      %131 = arith.muli %arg0, %130 : i32
      %c1_i32_43 = arith.constant 1 : i32
      %132 = arith.subi %c1_i32_43, %arg0 : i32
      %133 = arith.muli %132, %c2_i32 : i32
      %134 = arith.addi %131, %133 : i32
      %135 = arith.truncf %129 : vector<8x128xf32> to vector<8x128xbf16>
      %cst_44 = arith.constant dense<0.000000e+00> : vector<8x384xf32>
      %136 = tpu.matmul %135, %18, %cst_44 {dimension_numbers = #tpu.dot_dimension_numbers<[1], [0], [0], [1], [0, 0, 1, 1], [], []>} : vector<8x128xbf16>, vector<128x384xbf16>, vector<8x384xf32> -> vector<8x384xf32>
      %c0_45 = arith.constant 0 : index
      %137 = arith.index_cast %134 : i32 to index
      %c0_46 = arith.constant 0 : index
      %c0_47 = arith.constant 0 : index
      %138 = vector.load %arg4[%c0_45, %137, %c0_46, %c0_47] : memref<1x4x8x384xbf16, #tpu.memory_space<vmem>>, vector<1x1x8x384xbf16>
      %139 = vector.shape_cast %138 : vector<1x1x8x384xbf16> to vector<8x384xbf16>
      %140 = arith.extf %139 : vector<8x384xbf16> to vector<8x384xf32>
      %141 = vector.extract_strided_slice %140 {offsets = [0, 0], sizes = [8, 128], strides = [1, 1]} : vector<8x384xf32> to vector<8x128xf32>
      %142 = vector.extract_strided_slice %136 {offsets = [0, 0], sizes = [8, 128], strides = [1, 1]} : vector<8x384xf32> to vector<8x128xf32>
      %143 = arith.addf %141, %142 : vector<8x128xf32>
      %144 = arith.negf %143 : vector<8x128xf32>
      %145 = math.exp %144 : vector<8x128xf32>
      %cst_48 = arith.constant 1.000000e+00 : f32
      %146 = vector.broadcast %cst_48 : f32 to vector<8x128xf32>
      %147 = arith.addf %146, %145 : vector<8x128xf32>
      %148 = arith.divf %146, %147 : vector<8x128xf32>
      %149 = vector.extract_strided_slice %140 {offsets = [0, 256], sizes = [8, 128], strides = [1, 1]} : vector<8x384xf32> to vector<8x128xf32>
      %150 = vector.extract_strided_slice %136 {offsets = [0, 256], sizes = [8, 128], strides = [1, 1]} : vector<8x384xf32> to vector<8x128xf32>
      %151 = arith.addf %150, %23 : vector<8x128xf32>
      %152 = arith.mulf %148, %151 : vector<8x128xf32>
      %153 = arith.addf %149, %152 : vector<8x128xf32>
      %154 = math.tanh %153 : vector<8x128xf32>
      %155 = vector.extract_strided_slice %140 {offsets = [0, 128], sizes = [8, 128], strides = [1, 1]} : vector<8x384xf32> to vector<8x128xf32>
      %156 = vector.extract_strided_slice %136 {offsets = [0, 128], sizes = [8, 128], strides = [1, 1]} : vector<8x384xf32> to vector<8x128xf32>
      %157 = arith.addf %155, %156 : vector<8x128xf32>
      %158 = arith.negf %157 : vector<8x128xf32>
      %159 = math.exp %158 : vector<8x128xf32>
      %cst_49 = arith.constant 1.000000e+00 : f32
      %160 = vector.broadcast %cst_49 : f32 to vector<8x128xf32>
      %161 = arith.addf %160, %159 : vector<8x128xf32>
      %162 = arith.divf %160, %161 : vector<8x128xf32>
      %cst_50 = arith.constant 1.000000e+00 : f32
      %163 = vector.broadcast %cst_50 : f32 to vector<8x128xf32>
      %164 = arith.subf %163, %162 : vector<8x128xf32>
      %165 = arith.subf %154, %129 : vector<8x128xf32>
      %166 = arith.mulf %164, %165 : vector<8x128xf32>
      %167 = arith.addf %129, %166 : vector<8x128xf32>
      %168 = arith.addi %5, %134 : i32
      %169 = vector.broadcast %168 : i32 to vector<8x1xi32>
      %170 = arith.cmpi slt, %169, %19 : vector<8x1xi32>
      %cst_51 = arith.constant 0.000000e+00 : f32
      %171 = vector.shape_cast %170 : vector<8x1xi1> to vector<8x1xi1>
      %172 = vector.broadcast %171 : vector<8x1xi1> to vector<8x128xi1>
      %173 = vector.broadcast %cst_51 : f32 to vector<8x128xf32>
      %174 = arith.select %172, %167, %173 : vector<8x128xi1>, vector<8x128xf32>
      %c0_52 = arith.constant 0 : index
      %175 = arith.index_cast %134 : i32 to index
      %c0_53 = arith.constant 0 : index
      %c0_54 = arith.constant 0 : index
      %176 = vector.load %arg7[%c0_52, %175, %c0_53, %c0_54] : memref<1x4x8x128xf32, #tpu.memory_space<vmem>>, vector<1x1x8x128xf32>
      %177 = vector.shape_cast %176 : vector<1x1x8x128xf32> to vector<8x128xf32>
      %178 = vector.shape_cast %174 : vector<8x128xf32> to vector<1x1x8x128xf32>
      tpu.vector_store %arg7[%c0_52, %175, %c0_53, %c0_54], %178 {strides = array<i32>} : memref<1x4x8x128xf32, #tpu.memory_space<vmem>>, vector<1x1x8x128xf32>,
      %179 = vector.shape_cast %170 : vector<8x1xi1> to vector<8x1xi1>
      %180 = vector.broadcast %179 : vector<8x1xi1> to vector<8x128xi1>
      %181 = arith.select %180, %167, %129 : vector<8x128xi1>, vector<8x128xf32>
      %c3_i32_55 = arith.constant 3 : i32
      %c3_i32_56 = arith.constant 3 : i32
      %182 = arith.subi %c3_i32_56, %c3_i32_55 : i32
      %183 = arith.muli %arg0, %182 : i32
      %c1_i32_57 = arith.constant 1 : i32
      %184 = arith.subi %c1_i32_57, %arg0 : i32
      %185 = arith.muli %184, %c3_i32_55 : i32
      %186 = arith.addi %183, %185 : i32
      %187 = arith.truncf %181 : vector<8x128xf32> to vector<8x128xbf16>
      %cst_58 = arith.constant dense<0.000000e+00> : vector<8x384xf32>
      %188 = tpu.matmul %187, %18, %cst_58 {dimension_numbers = #tpu.dot_dimension_numbers<[1], [0], [0], [1], [0, 0, 1, 1], [], []>} : vector<8x128xbf16>, vector<128x384xbf16>, vector<8x384xf32> -> vector<8x384xf32>
      %c0_59 = arith.constant 0 : index
      %189 = arith.index_cast %186 : i32 to index
      %c0_60 = arith.constant 0 : index
      %c0_61 = arith.constant 0 : index
      %190 = vector.load %arg4[%c0_59, %189, %c0_60, %c0_61] : memref<1x4x8x384xbf16, #tpu.memory_space<vmem>>, vector<1x1x8x384xbf16>
      %191 = vector.shape_cast %190 : vector<1x1x8x384xbf16> to vector<8x384xbf16>
      %192 = arith.extf %191 : vector<8x384xbf16> to vector<8x384xf32>
      %193 = vector.extract_strided_slice %192 {offsets = [0, 0], sizes = [8, 128], strides = [1, 1]} : vector<8x384xf32> to vector<8x128xf32>
      %194 = vector.extract_strided_slice %188 {offsets = [0, 0], sizes = [8, 128], strides = [1, 1]} : vector<8x384xf32> to vector<8x128xf32>
      %195 = arith.addf %193, %194 : vector<8x128xf32>
      %196 = arith.negf %195 : vector<8x128xf32>
      %197 = math.exp %196 : vector<8x128xf32>
      %cst_62 = arith.constant 1.000000e+00 : f32
      %198 = vector.broadcast %cst_62 : f32 to vector<8x128xf32>
      %199 = arith.addf %198, %197 : vector<8x128xf32>
      %200 = arith.divf %198, %199 : vector<8x128xf32>
      %201 = vector.extract_strided_slice %192 {offsets = [0, 256], sizes = [8, 128], strides = [1, 1]} : vector<8x384xf32> to vector<8x128xf32>
      %202 = vector.extract_strided_slice %188 {offsets = [0, 256], sizes = [8, 128], strides = [1, 1]} : vector<8x384xf32> to vector<8x128xf32>
      %203 = arith.addf %202, %23 : vector<8x128xf32>
      %204 = arith.mulf %200, %203 : vector<8x128xf32>
      %205 = arith.addf %201, %204 : vector<8x128xf32>
      %206 = math.tanh %205 : vector<8x128xf32>
      %207 = vector.extract_strided_slice %192 {offsets = [0, 128], sizes = [8, 128], strides = [1, 1]} : vector<8x384xf32> to vector<8x128xf32>
      %208 = vector.extract_strided_slice %188 {offsets = [0, 128], sizes = [8, 128], strides = [1, 1]} : vector<8x384xf32> to vector<8x128xf32>
      %209 = arith.addf %207, %208 : vector<8x128xf32>
      %210 = arith.negf %209 : vector<8x128xf32>
      %211 = math.exp %210 : vector<8x128xf32>
      %cst_63 = arith.constant 1.000000e+00 : f32
      %212 = vector.broadcast %cst_63 : f32 to vector<8x128xf32>
      %213 = arith.addf %212, %211 : vector<8x128xf32>
      %214 = arith.divf %212, %213 : vector<8x128xf32>
      %cst_64 = arith.constant 1.000000e+00 : f32
      %215 = vector.broadcast %cst_64 : f32 to vector<8x128xf32>
      %216 = arith.subf %215, %214 : vector<8x128xf32>
      %217 = arith.subf %206, %181 : vector<8x128xf32>
      %218 = arith.mulf %216, %217 : vector<8x128xf32>
      %219 = arith.addf %181, %218 : vector<8x128xf32>
      %220 = arith.addi %5, %186 : i32
      %221 = vector.broadcast %220 : i32 to vector<8x1xi32>
      %222 = arith.cmpi slt, %221, %19 : vector<8x1xi32>
      %cst_65 = arith.constant 0.000000e+00 : f32
      %223 = vector.shape_cast %222 : vector<8x1xi1> to vector<8x1xi1>
      %224 = vector.broadcast %223 : vector<8x1xi1> to vector<8x128xi1>
      %225 = vector.broadcast %cst_65 : f32 to vector<8x128xf32>
      %226 = arith.select %224, %219, %225 : vector<8x128xi1>, vector<8x128xf32>
      %c0_66 = arith.constant 0 : index
      %227 = arith.index_cast %186 : i32 to index
      %c0_67 = arith.constant 0 : index
      %c0_68 = arith.constant 0 : index
      %228 = vector.load %arg7[%c0_66, %227, %c0_67, %c0_68] : memref<1x4x8x128xf32, #tpu.memory_space<vmem>>, vector<1x1x8x128xf32>
      %229 = vector.shape_cast %228 : vector<1x1x8x128xf32> to vector<8x128xf32>
      %230 = vector.shape_cast %226 : vector<8x128xf32> to vector<1x1x8x128xf32>
      tpu.vector_store %arg7[%c0_66, %227, %c0_67, %c0_68], %230 {strides = array<i32>} : memref<1x4x8x128xf32, #tpu.memory_space<vmem>>, vector<1x1x8x128xf32>,
      %231 = vector.shape_cast %222 : vector<8x1xi1> to vector<8x1xi1>
      %232 = vector.broadcast %231 : vector<8x1xi1> to vector<8x128xi1>
      %233 = arith.select %232, %219, %181 : vector<8x128xi1>, vector<8x128xf32>
      %c4_i32_69 = arith.constant 4 : i32
      %c0_70 = arith.constant 0 : index
      %c0_71 = arith.constant 0 : index
      %c0_72 = arith.constant 0 : index
      %234 = vector.load %arg8[%c0_70, %c0_71, %c0_72] : memref<1x8x128xf32, #tpu.memory_space<vmem>>, vector<1x8x128xf32>
      %235 = vector.shape_cast %234 : vector<1x8x128xf32> to vector<8x128xf32>
      %236 = vector.shape_cast %233 : vector<8x128xf32> to vector<1x8x128xf32>
      tpu.vector_store %arg8[%c0_70, %c0_71, %c0_72], %236 {strides = array<i32>} : memref<1x8x128xf32, #tpu.memory_space<vmem>>, vector<1x8x128xf32>,
    } else {
    }
    return
  }
  func.func @transform_0(%arg0: i32, %arg1: i32, %arg2: memref<1xi32, #tpu.memory_space<smem>>) -> (i32, i32) {
    %c0_i32 = arith.constant 0 : i32
    %c0_i32_0 = arith.constant 0 : i32
    %c0_i32_1 = arith.constant 0 : i32
    return %c0_i32, %c0_i32_0 : i32, i32
  }
  func.func @transform_1(%arg0: i32, %arg1: i32, %arg2: memref<1xi32, #tpu.memory_space<smem>>) -> (i32, i32, i32, i32) {
    %c1_i32 = arith.constant 1 : i32
    %0 = arith.subi %c1_i32, %arg1 : i32
    %1 = arith.muli %arg0, %0 : i32
    %c1_i32_0 = arith.constant 1 : i32
    %2 = arith.subi %c1_i32_0, %arg0 : i32
    %3 = arith.muli %2, %arg1 : i32
    %4 = arith.addi %1, %3 : i32
    %c0_i32 = arith.constant 0 : i32
    %c0_i32_1 = arith.constant 0 : i32
    %c0_i32_2 = arith.constant 0 : i32
    return %arg0, %4, %c0_i32, %c0_i32_1 : i32, i32, i32, i32
  }
  func.func @transform_2(%arg0: i32, %arg1: i32, %arg2: memref<1xi32, #tpu.memory_space<smem>>) -> (i32, i32, i32) {
    %c0_i32 = arith.constant 0 : i32
    %c0_i32_0 = arith.constant 0 : i32
    %c0_i32_1 = arith.constant 0 : i32
    return %arg0, %c0_i32, %c0_i32_0 : i32, i32, i32
  }
  func.func @transform_3(%arg0: i32, %arg1: i32, %arg2: memref<1xi32, #tpu.memory_space<smem>>) -> (i32, i32, i32) {
    %c0_i32 = arith.constant 0 : i32
    %c0_i32_0 = arith.constant 0 : i32
    %c0_i32_1 = arith.constant 0 : i32
    return %arg0, %c0_i32, %c0_i32_0 : i32, i32, i32
  }
  func.func @transform_4(%arg0: i32, %arg1: i32, %arg2: memref<1xi32, #tpu.memory_space<smem>>) -> (i32, i32, i32, i32) {
    %c1_i32 = arith.constant 1 : i32
    %0 = arith.subi %c1_i32, %arg1 : i32
    %1 = arith.muli %arg0, %0 : i32
    %c1_i32_0 = arith.constant 1 : i32
    %2 = arith.subi %c1_i32_0, %arg0 : i32
    %3 = arith.muli %2, %arg1 : i32
    %4 = arith.addi %1, %3 : i32
    %c0_i32 = arith.constant 0 : i32
    %c0_i32_1 = arith.constant 0 : i32
    %c0_i32_2 = arith.constant 0 : i32
    return %arg0, %4, %c0_i32, %c0_i32_1 : i32, i32, i32, i32
  }
  func.func @transform_5(%arg0: i32, %arg1: i32, %arg2: memref<1xi32, #tpu.memory_space<smem>>) -> (i32, i32, i32) {
    %c0_i32 = arith.constant 0 : i32
    %c0_i32_0 = arith.constant 0 : i32
    %c0_i32_1 = arith.constant 0 : i32
    return %arg0, %c0_i32, %c0_i32_0 : i32, i32, i32
  }
}

</mosaic_0001>

<llo_original>
// kernel: tpu_custom_call.1
$region0: #{tpu_custom_call.1}
  #allocation0 [shape = 'u32[]', space=smem, size = 0x4, offset = 0x4, fixed_abs, tag = 'smem constant byte address 0x4 - core index']
  #allocation1 [shape = 'u32[72,128]{1,0:T(1,128)}', space=vmem, size = 0x9000, scoped, tag = 'internal scratch']
  #allocation2 [shape = 's32[1]{0}', space=sflag, size = 0x4, scoped, tag = 'scoped memory for tpu_custom_call.1']
  #allocation3 [shape = 's32[1]{0:T(128)S(6)}', space=smem, size = 0x200, scoped, tag = 'prefetched SMEM operand 0']
  %s0 = inlined_call_operand.<no memory space> [shape: s32[1], index: 0, kind: input, shape index: {}]
  %s1 = inlined_call_operand.vmem [shape: s32[8,1], index: 1, kind: input, shape index: {}]
  %s2 = inlined_call_operand.hbm [shape: bf16[2,8,8,384], index: 2, kind: input, shape index: {}]
  %s3 = inlined_call_operand.hbm [shape: bf16[2,128,384], index: 3, kind: input, shape index: {}]
  %s4 = inlined_call_operand.vmem [shape: f32[2,1,128], index: 4, kind: input, shape index: {}]
  %s5 = inlined_call_operand.hbm [shape: f32[2,8,8,128], index: 5, kind: output, shape index: {0}]
  %s6 = inlined_call_operand.hbm [shape: f32[2,8,128], index: 6, kind: output, shape index: {1}]
  %7 = xla_tuple %s5, %s6
  %s8 = sld [smem:[#allocation0]]
  $region77: #{tpu_custom_call.1} parent=0
    _
  %s10 = ssub.s32 1, %s8
  %s11 = scalar_select 0, %s10, %s8
  %12 = sst [smem:[#allocation3]] %s0
  $region1: #{tpu_custom_call.1} parent=0
    #allocation4 [shape = 'u8[49152]{0}', space=vmem, size = 0xc000, scoped, tag = 'input window, operand 2']
    #allocation5 [shape = 's32[2]{0}', space=sflag, size = 0x8, scoped, tag = 'scoped memory for tpu_custom_call.1']
    #allocation6 [shape = 's32[2]{0}', space=sflag, size = 0x8, scoped, tag = 'scoped memory for tpu_custom_call.1']
    #allocation7 [shape = 'u8[196608]{0}', space=vmem, size = 0x30000, scoped, tag = 'input window, operand 3']
    #allocation8 [shape = 's32[2]{0}', space=sflag, size = 0x8, scoped, tag = 'scoped memory for tpu_custom_call.1']
    #allocation9 [shape = 'u8[32768]{0}', space=vmem, size = 0x8000, scoped, tag = 'output window, operand 0']
    #allocation10 [shape = 'u8[8192]{0}', space=vmem, size = 0x2000, scoped, tag = 'output window, operand 1']
    #allocation11 [shape = 's32[2]{0}', space=sflag, size = 0x8, scoped, tag = 'scoped memory for tpu_custom_call.1']
    %13 = vsyncpa [#allocation5], 0
    %s14 = scalar_lea.sflag [#allocation5], 1
    %15 = vsyncpa %s14, 0
    %16 = vsyncpa [#allocation8], 0
    %s17 = scalar_lea.sflag [#allocation8], 1
    %18 = vsyncpa %s17, 0
    %19 = vsyncpa [#allocation6], 0
    %s20 = scalar_lea.sflag [#allocation6], 1
    %21 = vsyncpa %s20, 0
    %22 = vsyncpa [#allocation11], 0
    %s23 = scalar_lea.sflag [#allocation11], 1
    %24 = vsyncpa %s23, 0
    loop: start=0, step=1, limit=6
    $region2: #{tpu_custom_call.1} parent=1 // loop_pre_header
      _
    $region3: #{tpu_custom_call.1} parent=1 // loop_header
      %s26 = sphi 0, %s30
      %p27 = scmp.ge.s32.totalorder %s26, 6
      %s33 = sphi 0, %s45
      %s34 = sphi 0, %s41
      %s35 = sphi 0, %s33
      %s36 = sphi 0, %s34
      %s37 = sphi 0, %s35
      %s38 = sphi 0, %s36
      %s46 = sphi 0, %s46
      %s48 = sphi 0, %s46
      %s49 = sphi 0, %s48
      %s63 = sphi 0, %s49
      %s81 = sphi 0, %s83
      %s84 = sphi 0, %s81
      %s85 = sphi 0, %s84
      %s101 = sphi 0, %s85
      %s107 = sphi 0, %s109
      %s110 = sphi 0, %s107
      %s111 = sphi 0, %s110
      %s127 = sphi 0, %s111
      %s133 = sphi 0, %s135
      %s136 = sphi 0, %s133
      %s137 = sphi 0, %s136
      %s153 = sphi 0, %s137
      %s171 = sphi 0, %s173
      %s174 = sphi 0, %s171
      %s175 = sphi 0, %s174
      %s191 = sphi 0, %s175
      %s197 = sphi 0, %s199
      %s200 = sphi 0, %s197
      %s201 = sphi 0, %s200
      %s217 = sphi 0, %s201
    $region4: #{tpu_custom_call.1} parent=1 // loop_header_branch
      %29 = sbr.rel (%p27) target = $region8
    $region5: #{tpu_custom_call.1} parent=1 // loop_body
      %s31 = ssub.s32 %s26, 1
      %s32 = ssub.s32 %s26, 2
      %s39 = sadd.s32 1, %s34
      %p40 = scmp.ge.s32.totalorder %s39, 2
      %s41 = scalar_select %p40, 0, %s39
      %s42 = sadd.s32 1, %s33
      %s43 = scalar_select %p40, %s42, %s33
      %p44 = scmp.ge.s32.totalorder %s43, 2
      %s45 = scalar_select %p44, 0, %s43
      %s47 = sadd.s32 %s46, 1
      %p50 = scmp.eq.s32.totalorder %s26, 3
      %p51 = scmp.ne.s32.totalorder %s46, %s48
      %p52 = scmp.eq.s32.totalorder %s26, 0
      %p53 = por %p51, %p52
      %p54 = scmp.ne.s32.totalorder %s46, %s48
      %p55 = scmp.eq.s32.totalorder %s31, 3
      %p56 = por %p54, %p55
      %p57 = scmp.ne.s32.totalorder %s48, %s49
      %p58 = scmp.eq.s32.totalorder %s31, 0
      %p59 = por %p57, %p58
      %p60 = scmp.ne.s32.totalorder %s48, %s49
      %p61 = scmp.eq.s32.totalorder %s32, 3
      %p62 = por %p60, %p61
      %p64 = scmp.ne.s32.totalorder %s49, %s63
      %p65 = scmp.eq.s32.totalorder %s32, 0
      %p66 = por %p64, %p65
      %s67 = ssub.s32 1, %s34
      %s68 = smul.u32 %s33, %s67
      %s69 = ssub.s32 1, %s33
      %s70 = smul.u32 %s69, %s34
      %s71 = sadd.s32 %s68, %s70
      %s72 = ssub.s32 1, %s41
      %s73 = smul.u32 %s45, %s72
      %s74 = ssub.s32 1, %s45
      %s75 = smul.u32 %s74, %s41
      %s76 = sadd.s32 %s73, %s75
      %s77 = ssub.s32 %s33, %s45
      %s78 = ssub.s32 %s71, %s76
      %s79 = sor.u32 %s77, %s78
      %p80 = scmp.eq.s32.totalorder %s79, 0
      %s82 = sadd.s32 %s81, 1
      %s83 = scalar_select %p80, %s81, %s82
      %p86 = pneg %p80
      %p87 = scmp.eq.s32.totalorder %s26, 3
      %p88 = por %p86, %p87
      %p89 = scmp.ne.s32.totalorder %s81, %s84
      %p90 = scmp.eq.s32.totalorder %s26, 0
      %p91 = por %p89, %p90
      %p92 = scmp.ne.s32.totalorder %s81, %s84
      %p93 = scmp.eq.s32.totalorder %s31, 3
      %p94 = por %p92, %p93
      %p95 = scmp.ne.s32.totalorder %s84, %s85
      %p96 = scmp.eq.s32.totalorder %s31, 0
      %p97 = por %p95, %p96
      %p98 = scmp.ne.s32.totalorder %s84, %s85
      %p99 = scmp.eq.s32.totalorder %s32, 3
      %p100 = por %p98, %p99
      %p102 = scmp.ne.s32.totalorder %s85, %s101
      %p103 = scmp.eq.s32.totalorder %s32, 0
      %p104 = por %p102, %p103
      %s105 = ssub.s32 %s33, %s45
      %p106 = scmp.eq.s32.totalorder %s105, 0
      %s108 = sadd.s32 %s107, 1
      %s109 = scalar_select %p106, %s107, %s108
      %p112 = pneg %p106
      %p113 = scmp.eq.s32.totalorder %s26, 3
      %p114 = por %p112, %p113
      %p115 = scmp.ne.s32.totalorder %s107, %s110
      %p116 = scmp.eq.s32.totalorder %s26, 0
      %p117 = por %p115, %p116
      %p118 = scmp.ne.s32.totalorder %s107, %s110
      %p119 = scmp.eq.s32.totalorder %s31, 3
      %p120 = por %p118, %p119
      %p121 = scmp.ne.s32.totalorder %s110, %s111
      %p122 = scmp.eq.s32.totalorder %s31, 0
      %p123 = por %p121, %p122
      %p124 = scmp.ne.s32.totalorder %s110, %s111
      %p125 = scmp.eq.s32.totalorder %s32, 3
      %p126 = por %p124, %p125
      %p128 = scmp.ne.s32.totalorder %s111, %s127
      %p129 = scmp.eq.s32.totalorder %s32, 0
      %p130 = por %p128, %p129
      %s131 = ssub.s32 %s33, %s45
      %p132 = scmp.eq.s32.totalorder %s131, 0
      %s134 = sadd.s32 %s133, 1
      %s135 = scalar_select %p132, %s133, %s134
      %p138 = pneg %p132
      %p139 = scmp.eq.s32.totalorder %s26, 3
      %p140 = por %p138, %p139
      %p141 = scmp.ne.s32.totalorder %s133, %s136
      %p142 = scmp.eq.s32.totalorder %s26, 0
      %p143 = por %p141, %p142
      %p144 = scmp.ne.s32.totalorder %s133, %s136
      %p145 = scmp.eq.s32.totalorder %s31, 3
      %p146 = por %p144, %p145
      %p147 = scmp.ne.s32.totalorder %s136, %s137
      %p148 = scmp.eq.s32.totalorder %s31, 0
      %p149 = por %p147, %p148
      %p150 = scmp.ne.s32.totalorder %s136, %s137
      %p151 = scmp.eq.s32.totalorder %s32, 3
      %p152 = por %p150, %p151
      %p154 = scmp.ne.s32.totalorder %s137, %s153
      %p155 = scmp.eq.s32.totalorder %s32, 0
      %p156 = por %p154, %p155
      %s157 = ssub.s32 1, %s34
      %s158 = smul.u32 %s33, %s157
      %s159 = ssub.s32 1, %s33
      %s160 = smul.u32 %s159, %s34
      %s161 = sadd.s32 %s158, %s160
      %s162 = ssub.s32 1, %s41
      %s163 = smul.u32 %s45, %s162
      %s164 = ssub.s32 1, %s45
      %s165 = smul.u32 %s164, %s41
      %s166 = sadd.s32 %s163, %s165
      %s167 = ssub.s32 %s33, %s45
      %s168 = ssub.s32 %s161, %s166
      %s169 = sor.u32 %s167, %s168
      %p170 = scmp.eq.s32.totalorder %s169, 0
      %s172 = sadd.s32 %s171, 1
      %s173 = scalar_select %p170, %s171, %s172
      %p176 = pneg %p170
      %p177 = scmp.eq.s32.totalorder %s26, 3
      %p178 = por %p176, %p177
      %p179 = scmp.ne.s32.totalorder %s171, %s174
      %p180 = scmp.eq.s32.totalorder %s26, 0
      %p181 = por %p179, %p180
      %p182 = scmp.ne.s32.totalorder %s171, %s174
      %p183 = scmp.eq.s32.totalorder %s31, 3
      %p184 = por %p182, %p183
      %p185 = scmp.ne.s32.totalorder %s174, %s175
      %p186 = scmp.eq.s32.totalorder %s31, 0
      %p187 = por %p185, %p186
      %p188 = scmp.ne.s32.totalorder %s174, %s175
      %p189 = scmp.eq.s32.totalorder %s32, 3
      %p190 = por %p188, %p189
      %p192 = scmp.ne.s32.totalorder %s175, %s191
      %p193 = scmp.eq.s32.totalorder %s32, 0
      %p194 = por %p192, %p193
      %s195 = ssub.s32 %s33, %s45
      %p196 = scmp.eq.s32.totalorder %s195, 0
      %s198 = sadd.s32 %s197, 1
      %s199 = scalar_select %p196, %s197, %s198
      %p202 = pneg %p196
      %p203 = scmp.eq.s32.totalorder %s26, 3
      %p204 = por %p202, %p203
      %p205 = scmp.ne.s32.totalorder %s197, %s200
      %p206 = scmp.eq.s32.totalorder %s26, 0
      %p207 = por %p205, %p206
      %p208 = scmp.ne.s32.totalorder %s197, %s200
      %p209 = scmp.eq.s32.totalorder %s31, 3
      %p210 = por %p208, %p209
      %p211 = scmp.ne.s32.totalorder %s200, %s201
      %p212 = scmp.eq.s32.totalorder %s31, 0
      %p213 = por %p211, %p212
      %p214 = scmp.ne.s32.totalorder %s200, %s201
      %p215 = scmp.eq.s32.totalorder %s32, 3
      %p216 = por %p214, %p215
      %p218 = scmp.ne.s32.totalorder %s201, %s217
      %p219 = scmp.eq.s32.totalorder %s32, 0
      %p220 = por %p218, %p219
      %p221 = scmp.le.s32.totalorder 1, %s26
      %p222 = scmp.lt.s32.totalorder %s26, 5
      %p223 = pnand %p221, %p222
      %p224 = pneg %p223
      // Predicated region
      $region9: #{tpu_custom_call.1} parent=5 // pred_check
        _
      $region10: #{tpu_custom_call.1} parent=5 // pred_check_branch
        %226 = sbr.rel (%p223) target = $region12
      $region11: #{tpu_custom_call.1} parent=5 // pred_region
        %s227 = ssub.s32 %s26, 1
        // Predicated region
        $region13: #{tpu_custom_call.1} parent=11 // pred_check
          %p228 = pneg %p59
        $region14: #{tpu_custom_call.1} parent=11 // pred_check_branch
          %230 = sbr.rel (%p228) target = $region16
        $region15: #{tpu_custom_call.1} parent=11 // pred_region
          _
        $region16: #{tpu_custom_call.1} parent=11 // pred_fallthru
          _
      $region12: #{tpu_custom_call.1} parent=5 // pred_fallthru
        _
      %p231 = scmp.lt.s32.totalorder %s26, 4
      // Predicated region
      $region17: #{tpu_custom_call.1} parent=5 // pred_check
        %p232 = pneg %p231
      $region18: #{tpu_custom_call.1} parent=5 // pred_check_branch
        %234 = sbr.rel (%p232) target = $region20
      $region19: #{tpu_custom_call.1} parent=5 // pred_region
        // Predicated region
        $region21: #{tpu_custom_call.1} parent=19 // pred_check
          %p235 = pneg %p91
        $region22: #{tpu_custom_call.1} parent=19 // pred_check_branch
          %237 = sbr.rel (%p235) target = $region24
        $region23: #{tpu_custom_call.1} parent=19 // pred_region
          %s238 = sand.u32 %s81, 1
          %s239 = scalar_lea.sflag [#allocation5], %s238
          %s240 = sand.u32 %s81, 1
          %s241 = smul.addr %s240, 48
          %s242 = scalar_lea.vmem [#allocation4], %s241
          %s243 = ssub.s32 1, %s34
          %s244 = smul.u32 %s33, %s243
          %s245 = ssub.s32 1, %s33
          %s246 = smul.u32 %s245, %s34
          %s247 = sadd.s32 %s244, %s246
          %s248 = smul.u32 4, %s247
          %250 = vsyncadd %s239, 0
          %s251 = smul.addr %s248, 3
          %s252 = smul.addr %s33, 24
          %s253 = sadd.s32 %s251, %s252
          %s254 = smul.addr %s253, 4
          %s255 = scalar_lea.hbm %s2, %s254
          %s256 = sshll.u32 %s255, 4
          %s257 = int_to_ptr.hbm [resolvable:$true] %s256
          %s258 = sshll.u32 %s242, 4
          %s259 = int_to_ptr.vmem [resolvable:$true] %s258
          %264 = dma.hbm_to_vmem [thread:$0]  %s257, 768, %s259, %s239, 192, 192, 12
        $region24: #{tpu_custom_call.1} parent=19 // pred_fallthru
          _
        // Predicated region
        $region25: #{tpu_custom_call.1} parent=19 // pred_check
          %p265 = pneg %p117
        $region26: #{tpu_custom_call.1} parent=19 // pred_check_branch
          %267 = sbr.rel (%p265) target = $region28
        $region27: #{tpu_custom_call.1} parent=19 // pred_region
          %s268 = sand.u32 %s107, 1
          %s269 = scalar_lea.sflag [#allocation8], %s268
          %s270 = sand.u32 %s107, 1
          %s271 = smul.addr %s270, 192
          %s272 = scalar_lea.vmem [#allocation7], %s271
          %274 = vsyncadd %s269, 0
          %s275 = smul.addr %s33, 48
          %s276 = smul.addr %s275, 4
          %s277 = scalar_lea.hbm %s3, %s276
          %s278 = sshll.u32 %s277, 4
          %s279 = int_to_ptr.hbm [resolvable:$true] %s278
          %s280 = sshll.u32 %s272, 4
          %s281 = int_to_ptr.vmem [resolvable:$true] %s280
          %286 = dma.hbm_to_vmem [thread:$0]  %s279, 3072, %s281, %s269, 192, 192, 12
        $region28: #{tpu_custom_call.1} parent=19 // pred_fallthru
          _
        // Predicated region
        $region29: #{tpu_custom_call.1} parent=19 // pred_check
          %p287 = pneg %p143
        $region30: #{tpu_custom_call.1} parent=19 // pred_check_branch
          %289 = sbr.rel (%p287) target = $region32
        $region31: #{tpu_custom_call.1} parent=19 // pred_region
          %p290 = scmp.lt.s32.totalorder %s33, 1
          %s291 = scalar_select %p290, %s33, 1
          %s292 = scalar_lea.vmem %s4, %s291
        $region32: #{tpu_custom_call.1} parent=19 // pred_fallthru
          _
      $region20: #{tpu_custom_call.1} parent=5 // pred_fallthru
        _
      %p293 = scmp.le.s32.totalorder 1, %s26
      %p294 = scmp.lt.s32.totalorder %s26, 5
      %p295 = pnand %p293, %p294
      %p296 = pneg %p295
      // Predicated region
      $region33: #{tpu_custom_call.1} parent=5 // pred_check
        _
      $region34: #{tpu_custom_call.1} parent=5 // pred_check_branch
        %298 = sbr.rel (%p295) target = $region36
      $region35: #{tpu_custom_call.1} parent=5 // pred_region
        %s299 = ssub.s32 %s26, 1
        %s300 = sand.u32 %s84, 1
        %s301 = scalar_lea.sflag [#allocation5], %s300
        %s302 = sand.u32 %s84, 1
        %s303 = smul.addr %s302, 48
        %s304 = scalar_lea.vmem [#allocation4], %s303
        // Predicated region
        $region37: #{tpu_custom_call.1} parent=35 // pred_check
          %p305 = pneg %p97
        $region38: #{tpu_custom_call.1} parent=35 // pred_check_branch
          %307 = sbr.rel (%p305) target = $region40
        $region39: #{tpu_custom_call.1} parent=35 // pred_region
          %309 = dma.done %s301, 768
        $region40: #{tpu_custom_call.1} parent=35 // pred_fallthru
          _
        %s310 = sand.u32 %s110, 1
        %s311 = scalar_lea.sflag [#allocation8], %s310
        %s312 = sand.u32 %s110, 1
        %s313 = smul.addr %s312, 192
        %s314 = scalar_lea.vmem [#allocation7], %s313
        // Predicated region
        $region41: #{tpu_custom_call.1} parent=35 // pred_check
          %p315 = pneg %p123
        $region42: #{tpu_custom_call.1} parent=35 // pred_check_branch
          %317 = sbr.rel (%p315) target = $region44
        $region43: #{tpu_custom_call.1} parent=35 // pred_region
          %319 = dma.done %s311, 3072
        $region44: #{tpu_custom_call.1} parent=35 // pred_fallthru
          _
        %p320 = pneg %p59
        %p321 = pneg %p56
        %s322 = sand.u32 %s84, 1
        %s323 = scalar_lea.sflag [#allocation5], %s322
        %s324 = sand.u32 %s84, 1
        %s325 = smul.addr %s324, 48
        %s326 = scalar_lea.vmem [#allocation4], %s325
        %p327 = pneg %p97
        %p328 = pneg %p94
        %s329 = sand.u32 %s110, 1
        %s330 = scalar_lea.sflag [#allocation8], %s329
        %s331 = sand.u32 %s110, 1
        %s332 = smul.addr %s331, 192
        %s333 = scalar_lea.vmem [#allocation7], %s332
        %p334 = pneg %p123
        %p335 = pneg %p120
        %p336 = scmp.lt.s32.totalorder %s35, 1
        %s337 = scalar_select %p336, %s35, 1
        %s338 = scalar_lea.vmem %s4, %s337
        %p339 = pneg %p149
        %p340 = pneg %p146
        %p341 = pneg %p187
        %p342 = pneg %p184
        %s343 = sand.u32 %s174, 1
        %s344 = scalar_lea.sflag [#allocation6], %s343
        %s345 = sand.u32 %s174, 1
        %s346 = smul.addr %s345, 32
        %s347 = scalar_lea.vmem [#allocation9], %s346
        %p348 = pneg %p213
        %p349 = pneg %p210
        %s350 = sand.u32 %s200, 1
        %s351 = scalar_lea.sflag [#allocation11], %s350
        %s352 = sand.u32 %s200, 1
        %s353 = smul.addr %s352, 8
        %s354 = scalar_lea.vmem [#allocation10], %s353
        %s355 = ssub.s32 1, %s36
        %s356 = smul.u32 %s35, %s355
        %s357 = ssub.s32 1, %s35
        %s358 = smul.u32 %s357, %s36
        %s359 = sadd.s32 %s356, %s358
        %s360 = smul.u32 4, %s359
        %p361 = scmp.lt.s32.totalorder %s35, 1
        %s362 = scalar_select %p361, %s35, 1
        %s363 = scalar_lea.vmem %s4, %s362
        %s364 = ssub.s32 1, %s36
        %s365 = smul.u32 %s35, %s364
        %s366 = ssub.s32 1, %s35
        %s367 = smul.u32 %s366, %s36
        %s368 = sadd.s32 %s365, %s367
        %s369 = smul.u32 4, %s368
        %s370 = ssub.s32 1, %s36
        %s371 = smul.u32 %s35, %s370
        %s372 = ssub.s32 1, %s35
        %s373 = smul.u32 %s372, %s36
        %s374 = sadd.s32 %s371, %s373
        %s375 = smul.u32 %s374, 4
        %p376 = scmp.eq.s32.totalorder %s36, 0
        // Predicated region
        $region45: #{tpu_custom_call.1} parent=35 // pred_check
          %p377 = pneg %p376
        $region46: #{tpu_custom_call.1} parent=35 // pred_check_branch
          %379 = sbr.rel (%p377) target = $region48
        $region47: #{tpu_custom_call.1} parent=35 // pred_region
          %380 = vst [vmem:[%s354] sm:$0xff] 0.0
        $region48: #{tpu_custom_call.1} parent=35 // pred_fallthru
          _
        %s381 = sld [smem:[#allocation3]]
        %p382 = scmp.ge.s32.totalorder %s375, %s381
        // Predicated region
        $region49: #{tpu_custom_call.1} parent=35 // pred_check
          %p383 = pneg %p382
        $region50: #{tpu_custom_call.1} parent=35 // pred_check_branch
          %385 = sbr.rel (%p383) target = $region52
        $region51: #{tpu_custom_call.1} parent=35 // pred_region
          %386 = vst [vmem:[%s347] sm:$0xff] 0.0
          %387 = vst [vmem:[%s347 + $0x8] sm:$0xff] 0.0
          %388 = vst [vmem:[%s347 + $0x10] sm:$0xff] 0.0
          %389 = vst [vmem:[%s347 + $0x18] sm:$0xff] 0.0
        $region52: #{tpu_custom_call.1} parent=35 // pred_fallthru
          _
        %s390 = sld [smem:[#allocation3]]
        %p391 = scmp.lt.s32.totalorder %s375, %s390
        // Predicated region
        $region53: #{tpu_custom_call.1} parent=35 // pred_check
          %p392 = pneg %p391
        $region54: #{tpu_custom_call.1} parent=35 // pred_check_branch
          %394 = sbr.rel (%p392) target = $region56
        $region55: #{tpu_custom_call.1} parent=35 // pred_region
          %v395 = vld [vmem:[%s314] sm:$0xff]
          %v396 = vld [vmem:[%s314 + $0x8] sm:$0xf]
          %v397 = vld [vmem:[%s314 + $0xc] sm:$0xff]
          %v398 = vld [vmem:[%s314 + $0x14] sm:$0xf]
          %v399 = vld [vmem:[%s314 + $0x18] sm:$0xff]
          %v400 = vld [vmem:[%s314 + $0x20] sm:$0xf]
          %v401 = vld [vmem:[%s314 + $0x24] sm:$0xff]
          %v402 = vld [vmem:[%s314 + $0x2c] sm:$0xf]
          %v403 = vld [vmem:[%s314 + $0x30] sm:$0xff]
          %v404 = vld [vmem:[%s314 + $0x38] sm:$0xf]
          %v405 = vld [vmem:[%s314 + $0x3c] sm:$0xff]
          %v406 = vld [vmem:[%s314 + $0x44] sm:$0xf]
          %v407 = vld [vmem:[%s314 + $0x48] sm:$0xff]
          %v408 = vld [vmem:[%s314 + $0x50] sm:$0xf]
          %v409 = vld [vmem:[%s314 + $0x54] sm:$0xff]
          %v410 = vld [vmem:[%s314 + $0x5c] sm:$0xf]
          %v411 = vld [vmem:[%s314 + $0x60] sm:$0xff]
          %v412 = vld [vmem:[%s314 + $0x68] sm:$0xf]
          %v413 = vld [vmem:[%s314 + $0x6c] sm:$0xff]
          %v414 = vld [vmem:[%s314 + $0x74] sm:$0xf]
          %v415 = vld [vmem:[%s314 + $0x78] sm:$0xff]
          %v416 = vld [vmem:[%s314 + $0x80] sm:$0xf]
          %v417 = vld [vmem:[%s314 + $0x84] sm:$0xff]
          %v418 = vld [vmem:[%s314 + $0x8c] sm:$0xf]
          %v419 = vld [vmem:[%s314 + $0x90] sm:$0xff]
          %v420 = vld [vmem:[%s314 + $0x98] sm:$0xf]
          %v421 = vld [vmem:[%s314 + $0x9c] sm:$0xff]
          %v422 = vld [vmem:[%s314 + $0xa4] sm:$0xf]
          %v423 = vld [vmem:[%s314 + $0xa8] sm:$0xff]
          %v424 = vld [vmem:[%s314 + $0xb0] sm:$0xf]
          %v425 = vld [vmem:[%s314 + $0xb4] sm:$0xff]
          %v426 = vld [vmem:[%s314 + $0xbc] sm:$0xf]
          %v427 = vld [vmem:[%s1] sm:$0xff]
          %v428 = vld [vmem:[%s363] sm:$0x1]
          %v430 = vperm.slane %v428, 0
          %v432 = vld [vmem:[%s354] sm:$0xff]
          %s433 = smul.u32 %s35, 3
          %v434 = vpack.c.bf16 %v432, %v432
          %v467 = vunpack.c.l.b16 %v395
          %v468 = vunpack.c.h.b16 %v395
          %v469 = vunpack.c.l.b16 %v396
          %v470 = vunpack.c.l.b16 %v397
          %v471 = vunpack.c.h.b16 %v397
          %v472 = vunpack.c.l.b16 %v398
          %v473 = vunpack.c.l.b16 %v399
          %v474 = vunpack.c.h.b16 %v399
          %v475 = vunpack.c.l.b16 %v400
          %v476 = vunpack.c.l.b16 %v401
          %v477 = vunpack.c.h.b16 %v401
          %v478 = vunpack.c.l.b16 %v402
          %v479 = vunpack.c.l.b16 %v403
          %v480 = vunpack.c.h.b16 %v403
          %v481 = vunpack.c.l.b16 %v404
          %v482 = vunpack.c.l.b16 %v405
          %v483 = vunpack.c.h.b16 %v405
          %v484 = vunpack.c.l.b16 %v406
          %v485 = vunpack.c.l.b16 %v407
          %v486 = vunpack.c.h.b16 %v407
          %v487 = vunpack.c.l.b16 %v408
          %v488 = vunpack.c.l.b16 %v409
          %v489 = vunpack.c.h.b16 %v409
          %v490 = vunpack.c.l.b16 %v410
          %v491 = vunpack.c.l.b16 %v411
          %v492 = vunpack.c.h.b16 %v411
          %v493 = vunpack.c.l.b16 %v412
          %v494 = vunpack.c.l.b16 %v413
          %v495 = vunpack.c.h.b16 %v413
          %v496 = vunpack.c.l.b16 %v414
          %v497 = vunpack.c.l.b16 %v415
          %v498 = vunpack.c.h.b16 %v415
          %v499 = vunpack.c.l.b16 %v416
          %v500 = vunpack.c.l.b16 %v417
          %v501 = vunpack.c.h.b16 %v417
          %v502 = vunpack.c.l.b16 %v418
          %v503 = vunpack.c.l.b16 %v419
          %v504 = vunpack.c.h.b16 %v419
          %v505 = vunpack.c.l.b16 %v420
          %v506 = vunpack.c.l.b16 %v421
          %v507 = vunpack.c.h.b16 %v421
          %v508 = vunpack.c.l.b16 %v422
          %v509 = vunpack.c.l.b16 %v423
          %v510 = vunpack.c.h.b16 %v423
          %v511 = vunpack.c.l.b16 %v424
          %v512 = vunpack.c.l.b16 %v425
          %v513 = vunpack.c.h.b16 %v425
          %v514 = vunpack.c.l.b16 %v426
          %v515 = vpack.c.b16 %v470, %v467
          %v516 = vpack.c.b16 %v471, %v468
          %v517 = vpack.c.b16 %v472, %v469
          %v518 = vpack.c.b16 %v476, %v473
          %v519 = vpack.c.b16 %v477, %v474
          %v520 = vpack.c.b16 %v478, %v475
          %v521 = vpack.c.b16 %v482, %v479
          %v522 = vpack.c.b16 %v483, %v480
          %v523 = vpack.c.b16 %v484, %v481
          %v524 = vpack.c.b16 %v488, %v485
          %v525 = vpack.c.b16 %v489, %v486
          %v526 = vpack.c.b16 %v490, %v487
          %v527 = vpack.c.b16 %v494, %v491
          %v528 = vpack.c.b16 %v495, %v492
          %v529 = vpack.c.b16 %v496, %v493
          %v530 = vpack.c.b16 %v500, %v497
          %v531 = vpack.c.b16 %v501, %v498
          %v532 = vpack.c.b16 %v502, %v499
          %v533 = vpack.c.b16 %v506, %v503
          %v534 = vpack.c.b16 %v507, %v504
          %v535 = vpack.c.b16 %v508, %v505
          %v536 = vpack.c.b16 %v512, %v509
          %v537 = vpack.c.b16 %v513, %v510
          %v538 = vpack.c.b16 %v514, %v511
          %563 = vmatpush.bf16.msra.mxu0 %v536
          %564 = vmatpush.bf16.msra.mxu0 %v533
          %565 = vmatpush.bf16.msra.mxu0 %v530
          %566 = vmatpush.bf16.msra.mxu0 %v527
          %567 = vmatpush.bf16.msra.mxu0 %v524
          %568 = vmatpush.bf16.msra.mxu0 %v521
          %569 = vmatpush.bf16.msra.mxu0 %v518
          %570 = vmatpush.bf16.msra.mxu0 %v515
          %571 = vmatmul.bf16.gmra.mxu0 %v434
          %v572 = vpop.f32.mrf.mxu0
          %v573 = vadd.f32 0.0, %v572
          %v574 = vpop.f32.mrf.mxu0
          %575 = vdwg.mxu0
          %576 = vmatpush.bf16.msra.mxu0 %v537
          %577 = vmatpush.bf16.msra.mxu0 %v534
          %578 = vmatpush.bf16.msra.mxu0 %v531
          %579 = vmatpush.bf16.msra.mxu0 %v528
          %580 = vmatpush.bf16.msra.mxu0 %v525
          %581 = vmatpush.bf16.msra.mxu0 %v522
          %582 = vmatpush.bf16.msra.mxu0 %v519
          %583 = vmatpush.bf16.msra.mxu0 %v516
          %584 = vmatmul.bf16.gmra.mxu0 %v434
          %v585 = vpop.f32.mrf.mxu0
          %v586 = vadd.f32 0.0, %v585
          %v587 = vpop.f32.mrf.mxu0
          %588 = vdwg.mxu0
          %589 = vmatpush.bf16.msra.mxu0 %v538
          %590 = vmatpush.bf16.msra.mxu0 %v535
          %591 = vmatpush.bf16.msra.mxu0 %v532
          %592 = vmatpush.bf16.msra.mxu0 %v529
          %593 = vmatpush.bf16.msra.mxu0 %v526
          %594 = vmatpush.bf16.msra.mxu0 %v523
          %595 = vmatpush.bf16.msra.mxu0 %v520
          %596 = vmatpush.bf16.msra.mxu0 %v517
          %597 = vmatmul.bf16.gmra.mxu0 %v434
          %v598 = vpop.f32.mrf.mxu0
          %v599 = vadd.f32 0.0, %v598
          %v600 = vpop.f32.mrf.mxu0
          %601 = vdwg.mxu0
          %s602 = smul.u32 %s433, 3
          %s603 = smul.addr %s602, 4
          %s604 = scalar_lea.vmem %s304, %s603 [#allocation4]
          %v605 = vld [vmem:[%s604] sm:$0xff]
          %v606 = vld [vmem:[%s604 + $0x8] sm:$0xf]
          %v607 = vunpack.c.l.bf16 %v605
          %v608 = vunpack.c.h.bf16 %v605
          %v609 = vunpack.c.l.bf16 %v606
          %v610 = vadd.f32 %v607, %v573
          %v611 = vxor.u32 %v610, 2147483648
          %v612 = vmul.f32 %v611, 1.442695
          %v613 = vpow.pop %v612
          %v614 = vadd.f32 %v613, 1.0
          %v615 = vrcp.pop %v614
          %v616 = vmul.f32 %v614, %v615
          %v617 = vsub.f32 1.0, %v616
          %v618 = vmul.f32 %v615, %v617
          %v619 = vadd.f32 %v615, %v618
          %vm620 = vweird.f32 %v614
          %vm621 = vweird.f32 %v615
          %vm622 = vmor %vm620, %vm621
          %v623 = vsel %vm622, %v615, %v619
          %v624 = vand.u32 2147483647, %v614
          %vm625 = vcmp.eq.f32.partialorder %v624, 8.507059e+37
          %v626 = vand.u32 %v614, 2147483648
          %v627 = vor.u32 1.1754944e-38, %v626
          %v628 = vsel %vm625, %v627, %v623
          %v629 = vmul.f32 1.0, %v628
          %v630 = vadd.f32 %v599, %v430
          %v631 = vmul.f32 %v629, %v630
          %v632 = vadd.f32 %v609, %v631
          %v633 = vtanh.pop %v632
          %v634 = vadd.f32 %v608, %v586
          %v635 = vxor.u32 %v634, 2147483648
          %v636 = vmul.f32 %v635, 1.442695
          %v637 = vpow.pop %v636
          %v638 = vadd.f32 %v637, 1.0
          %v639 = vrcp.pop %v638
          %v640 = vmul.f32 %v638, %v639
          %v641 = vsub.f32 1.0, %v640
          %v642 = vmul.f32 %v639, %v641
          %v643 = vadd.f32 %v639, %v642
          %vm644 = vweird.f32 %v638
          %vm645 = vweird.f32 %v639
          %vm646 = vmor %vm644, %vm645
          %v647 = vsel %vm646, %v639, %v643
          %v648 = vand.u32 2147483647, %v638
          %vm649 = vcmp.eq.f32.partialorder %v648, 8.507059e+37
          %v650 = vand.u32 %v638, 2147483648
          %v651 = vor.u32 1.1754944e-38, %v650
          %v652 = vsel %vm649, %v651, %v647
          %v653 = vmul.f32 1.0, %v652
          %v654 = vsub.f32 1.0, %v653
          %v655 = vsub.f32 %v633, %v432
          %v656 = vmul.f32 %v654, %v655
          %v657 = vadd.f32 %v432, %v656
          %s658 = sadd.s32 %s375, %s433
          %v659 = vstv %s658
          %vm660 = vcmp.lt.s32.totalorder %v659, %v427
          %v661 = vsel %vm660, 1, 0
          %662 = vset.pattern.permute.xlu0 0
          %663 = vperm.xlu0 %662, %v661
          %v664 = vpop.permute.xlu0 %663
          %vm665 = vcmp.eq.s32.totalorder %v664, 1
          %v666 = vsel %vm665, %v657, 0.0
          %s667 = smul.u32 %s433, 8
          %s668 = scalar_lea.vmem %s347, %s667 [#allocation9]
          %669 = vst [vmem:[%s668] sm:$0xff] %v666
          %v670 = vsel %vm665, %v657, %v432
          %s671 = smul.u32 %s35, 2
          %s672 = sadd.s32 %s671, %s372
          %v673 = vpack.c.bf16 %v670, %v670
          %674 = vmatpush.bf16.msra.mxu0 %v536
          %675 = vmatpush.bf16.msra.mxu0 %v533
          %676 = vmatpush.bf16.msra.mxu0 %v530
          %677 = vmatpush.bf16.msra.mxu0 %v527
          %678 = vmatpush.bf16.msra.mxu0 %v524
          %679 = vmatpush.bf16.msra.mxu0 %v521
          %680 = vmatpush.bf16.msra.mxu0 %v518
          %681 = vmatpush.bf16.msra.mxu0 %v515
          %682 = vmatmul.bf16.gmra.mxu0 %v673
          %v683 = vpop.f32.mrf.mxu0
          %v684 = vadd.f32 0.0, %v683
          %v685 = vpop.f32.mrf.mxu0
          %686 = vdwg.mxu0
          %687 = vmatpush.bf16.msra.mxu0 %v537
          %688 = vmatpush.bf16.msra.mxu0 %v534
          %689 = vmatpush.bf16.msra.mxu0 %v531
          %690 = vmatpush.bf16.msra.mxu0 %v528
          %691 = vmatpush.bf16.msra.mxu0 %v525
          %692 = vmatpush.bf16.msra.mxu0 %v522
          %693 = vmatpush.bf16.msra.mxu0 %v519
          %694 = vmatpush.bf16.msra.mxu0 %v516
          %695 = vmatmul.bf16.gmra.mxu0 %v673
          %v696 = vpop.f32.mrf.mxu0
          %v697 = vadd.f32 0.0, %v696
          %v698 = vpop.f32.mrf.mxu0
          %699 = vdwg.mxu0
          %700 = vmatpush.bf16.msra.mxu0 %v538
          %701 = vmatpush.bf16.msra.mxu0 %v535
          %702 = vmatpush.bf16.msra.mxu0 %v532
          %703 = vmatpush.bf16.msra.mxu0 %v529
          %704 = vmatpush.bf16.msra.mxu0 %v526
          %705 = vmatpush.bf16.msra.mxu0 %v523
          %706 = vmatpush.bf16.msra.mxu0 %v520
          %707 = vmatpush.bf16.msra.mxu0 %v517
          %708 = vmatmul.bf16.gmra.mxu0 %v673
          %v709 = vpop.f32.mrf.mxu0
          %v710 = vadd.f32 0.0, %v709
          %v711 = vpop.f32.mrf.mxu0
          %712 = vdwg.mxu0
          %s713 = smul.u32 %s672, 3
          %s714 = smul.addr %s713, 4
          %s715 = scalar_lea.vmem %s304, %s714 [#allocation4]
          %v716 = vld [vmem:[%s715] sm:$0xff]
          %v717 = vld [vmem:[%s715 + $0x8] sm:$0xf]
          %v718 = vunpack.c.l.bf16 %v716
          %v719 = vunpack.c.h.bf16 %v716
          %v720 = vunpack.c.l.bf16 %v717
          %v721 = vadd.f32 %v718, %v684
          %v722 = vxor.u32 %v721, 2147483648
          %v723 = vmul.f32 %v722, 1.442695
          %v724 = vpow.pop %v723
          %v725 = vadd.f32 %v724, 1.0
          %v726 = vrcp.pop %v725
          %v727 = vmul.f32 %v725, %v726
          %v728 = vsub.f32 1.0, %v727
          %v729 = vmul.f32 %v726, %v728
          %v730 = vadd.f32 %v726, %v729
          %vm731 = vweird.f32 %v725
          %vm732 = vweird.f32 %v726
          %vm733 = vmor %vm731, %vm732
          %v734 = vsel %vm733, %v726, %v730
          %v735 = vand.u32 2147483647, %v725
          %vm736 = vcmp.eq.f32.partialorder %v735, 8.507059e+37
          %v737 = vand.u32 %v725, 2147483648
          %v738 = vor.u32 1.1754944e-38, %v737
          %v739 = vsel %vm736, %v738, %v734
          %v740 = vmul.f32 1.0, %v739
          %v741 = vadd.f32 %v710, %v430
          %v742 = vmul.f32 %v740, %v741
          %v743 = vadd.f32 %v720, %v742
          %v744 = vtanh.pop %v743
          %v745 = vadd.f32 %v719, %v697
          %v746 = vxor.u32 %v745, 2147483648
          %v747 = vmul.f32 %v746, 1.442695
          %v748 = vpow.pop %v747
          %v749 = vadd.f32 %v748, 1.0
          %v750 = vrcp.pop %v749
          %v751 = vmul.f32 %v749, %v750
          %v752 = vsub.f32 1.0, %v751
          %v753 = vmul.f32 %v750, %v752
          %v754 = vadd.f32 %v750, %v753
          %vm755 = vweird.f32 %v749
          %vm756 = vweird.f32 %v750
          %vm757 = vmor %vm755, %vm756
          %v758 = vsel %vm757, %v750, %v754
          %v759 = vand.u32 2147483647, %v749
          %vm760 = vcmp.eq.f32.partialorder %v759, 8.507059e+37
          %v761 = vand.u32 %v749, 2147483648
          %v762 = vor.u32 1.1754944e-38, %v761
          %v763 = vsel %vm760, %v762, %v758
          %v764 = vmul.f32 1.0, %v763
          %v765 = vsub.f32 1.0, %v764
          %v766 = vsub.f32 %v744, %v670
          %v767 = vmul.f32 %v765, %v766
          %v768 = vadd.f32 %v670, %v767
          %s769 = sadd.s32 %s375, %s672
          %v770 = vstv %s769
          %vm771 = vcmp.lt.s32.totalorder %v770, %v427
          %v772 = vsel %vm771, 1, 0
          %773 = vset.pattern.permute.xlu0 0
          %774 = vperm.xlu0 %773, %v772
          %v775 = vpop.permute.xlu0 %774
          %vm776 = vcmp.eq.s32.totalorder %v775, 1
          %v777 = vsel %vm776, %v768, 0.0
          %s778 = smul.u32 %s672, 8
          %s779 = scalar_lea.vmem %s347, %s778 [#allocation9]
          %780 = vst [vmem:[%s779] sm:$0xff] %v777
          %v781 = vsel %vm776, %v768, %v670
          %s782 = smul.u32 %s372, 2
          %s783 = sadd.s32 %s35, %s782
          %v784 = vpack.c.bf16 %v781, %v781
          %785 = vmatpush.bf16.msra.mxu0 %v536
          %786 = vmatpush.bf16.msra.mxu0 %v533
          %787 = vmatpush.bf16.msra.mxu0 %v530
          %788 = vmatpush.bf16.msra.mxu0 %v527
          %789 = vmatpush.bf16.msra.mxu0 %v524
          %790 = vmatpush.bf16.msra.mxu0 %v521
          %791 = vmatpush.bf16.msra.mxu0 %v518
          %792 = vmatpush.bf16.msra.mxu0 %v515
          %793 = vmatmul.bf16.gmra.mxu0 %v784
          %v794 = vpop.f32.mrf.mxu0
          %v795 = vadd.f32 0.0, %v794
          %v796 = vpop.f32.mrf.mxu0
          %797 = vdwg.mxu0
          %798 = vmatpush.bf16.msra.mxu0 %v537
          %799 = vmatpush.bf16.msra.mxu0 %v534
          %800 = vmatpush.bf16.msra.mxu0 %v531
          %801 = vmatpush.bf16.msra.mxu0 %v528
          %802 = vmatpush.bf16.msra.mxu0 %v525
          %803 = vmatpush.bf16.msra.mxu0 %v522
          %804 = vmatpush.bf16.msra.mxu0 %v519
          %805 = vmatpush.bf16.msra.mxu0 %v516
          %806 = vmatmul.bf16.gmra.mxu0 %v784
          %v807 = vpop.f32.mrf.mxu0
          %v808 = vadd.f32 0.0, %v807
          %v809 = vpop.f32.mrf.mxu0
          %810 = vdwg.mxu0
          %811 = vmatpush.bf16.msra.mxu0 %v538
          %812 = vmatpush.bf16.msra.mxu0 %v535
          %813 = vmatpush.bf16.msra.mxu0 %v532
          %814 = vmatpush.bf16.msra.mxu0 %v529
          %815 = vmatpush.bf16.msra.mxu0 %v526
          %816 = vmatpush.bf16.msra.mxu0 %v523
          %817 = vmatpush.bf16.msra.mxu0 %v520
          %818 = vmatpush.bf16.msra.mxu0 %v517
          %819 = vmatmul.bf16.gmra.mxu0 %v784
          %v820 = vpop.f32.mrf.mxu0
          %v821 = vadd.f32 0.0, %v820
          %v822 = vpop.f32.mrf.mxu0
          %823 = vdwg.mxu0
          %s824 = smul.u32 %s783, 3
          %s825 = smul.addr %s824, 4
          %s826 = scalar_lea.vmem %s304, %s825 [#allocation4]
          %v827 = vld [vmem:[%s826] sm:$0xff]
          %v828 = vld [vmem:[%s826 + $0x8] sm:$0xf]
          %v829 = vunpack.c.l.bf16 %v827
          %v830 = vunpack.c.h.bf16 %v827
          %v831 = vunpack.c.l.bf16 %v828
          %v832 = vadd.f32 %v829, %v795
          %v833 = vxor.u32 %v832, 2147483648
          %v834 = vmul.f32 %v833, 1.442695
          %v835 = vpow.pop %v834
          %v836 = vadd.f32 %v835, 1.0
          %v837 = vrcp.pop %v836
          %v838 = vmul.f32 %v836, %v837
          %v839 = vsub.f32 1.0, %v838
          %v840 = vmul.f32 %v837, %v839
          %v841 = vadd.f32 %v837, %v840
          %vm842 = vweird.f32 %v836
          %vm843 = vweird.f32 %v837
          %vm844 = vmor %vm842, %vm843
          %v845 = vsel %vm844, %v837, %v841
          %v846 = vand.u32 2147483647, %v836
          %vm847 = vcmp.eq.f32.partialorder %v846, 8.507059e+37
          %v848 = vand.u32 %v836, 2147483648
          %v849 = vor.u32 1.1754944e-38, %v848
          %v850 = vsel %vm847, %v849, %v845
          %v851 = vmul.f32 1.0, %v850
          %v852 = vadd.f32 %v821, %v430
          %v853 = vmul.f32 %v851, %v852
          %v854 = vadd.f32 %v831, %v853
          %v855 = vtanh.pop %v854
          %v856 = vadd.f32 %v830, %v808
          %v857 = vxor.u32 %v856, 2147483648
          %v858 = vmul.f32 %v857, 1.442695
          %v859 = vpow.pop %v858
          %v860 = vadd.f32 %v859, 1.0
          %v861 = vrcp.pop %v860
          %v862 = vmul.f32 %v860, %v861
          %v863 = vsub.f32 1.0, %v862
          %v864 = vmul.f32 %v861, %v863
          %v865 = vadd.f32 %v861, %v864
          %vm866 = vweird.f32 %v860
          %vm867 = vweird.f32 %v861
          %vm868 = vmor %vm866, %vm867
          %v869 = vsel %vm868, %v861, %v865
          %v870 = vand.u32 2147483647, %v860
          %vm871 = vcmp.eq.f32.partialorder %v870, 8.507059e+37
          %v872 = vand.u32 %v860, 2147483648
          %v873 = vor.u32 1.1754944e-38, %v872
          %v874 = vsel %vm871, %v873, %v869
          %v875 = vmul.f32 1.0, %v874
          %v876 = vsub.f32 1.0, %v875
          %v877 = vsub.f32 %v855, %v781
          %v878 = vmul.f32 %v876, %v877
          %v879 = vadd.f32 %v781, %v878
          %s880 = sadd.s32 %s375, %s783
          %v881 = vstv %s880
          %vm882 = vcmp.lt.s32.totalorder %v881, %v427
          %v883 = vsel %vm882, 1, 0
          %884 = vset.pattern.permute.xlu0 0
          %885 = vperm.xlu0 %884, %v883
          %v886 = vpop.permute.xlu0 %885
          %vm887 = vcmp.eq.s32.totalorder %v886, 1
          %v888 = vsel %vm887, %v879, 0.0
          %s889 = smul.u32 %s783, 8
          %s890 = scalar_lea.vmem %s347, %s889 [#allocation9]
          %891 = vst [vmem:[%s890] sm:$0xff] %v888
          %v892 = vsel %vm887, %v879, %v781
          %s893 = smul.u32 %s372, 3
          %v894 = vpack.c.bf16 %v892, %v892
          %895 = vmatpush.bf16.msra.mxu0 %v536
          %896 = vmatpush.bf16.msra.mxu0 %v533
          %897 = vmatpush.bf16.msra.mxu0 %v530
          %898 = vmatpush.bf16.msra.mxu0 %v527
          %899 = vmatpush.bf16.msra.mxu0 %v524
          %900 = vmatpush.bf16.msra.mxu0 %v521
          %901 = vmatpush.bf16.msra.mxu0 %v518
          %902 = vmatpush.bf16.msra.mxu0 %v515
          %903 = vmatmul.bf16.gmra.mxu0 %v894
          %v904 = vpop.f32.mrf.mxu0
          %v905 = vadd.f32 0.0, %v904
          %v906 = vpop.f32.mrf.mxu0
          %907 = vdwg.mxu0
          %908 = vmatpush.bf16.msra.mxu0 %v537
          %909 = vmatpush.bf16.msra.mxu0 %v534
          %910 = vmatpush.bf16.msra.mxu0 %v531
          %911 = vmatpush.bf16.msra.mxu0 %v528
          %912 = vmatpush.bf16.msra.mxu0 %v525
          %913 = vmatpush.bf16.msra.mxu0 %v522
          %914 = vmatpush.bf16.msra.mxu0 %v519
          %915 = vmatpush.bf16.msra.mxu0 %v516
          %916 = vmatmul.bf16.gmra.mxu0 %v894
          %v917 = vpop.f32.mrf.mxu0
          %v918 = vadd.f32 0.0, %v917
          %v919 = vpop.f32.mrf.mxu0
          %920 = vdwg.mxu0
          %921 = vmatpush.bf16.msra.mxu0 %v538
          %922 = vmatpush.bf16.msra.mxu0 %v535
          %923 = vmatpush.bf16.msra.mxu0 %v532
          %924 = vmatpush.bf16.msra.mxu0 %v529
          %925 = vmatpush.bf16.msra.mxu0 %v526
          %926 = vmatpush.bf16.msra.mxu0 %v523
          %927 = vmatpush.bf16.msra.mxu0 %v520
          %928 = vmatpush.bf16.msra.mxu0 %v517
          %929 = vmatmul.bf16.gmra.mxu0 %v894
          %v930 = vpop.f32.mrf.mxu0
          %v931 = vadd.f32 0.0, %v930
          %v932 = vpop.f32.mrf.mxu0
          %933 = vdwg.mxu0
          %s934 = smul.u32 %s893, 3
          %s935 = smul.addr %s934, 4
          %s936 = scalar_lea.vmem %s304, %s935 [#allocation4]
          %v937 = vld [vmem:[%s936] sm:$0xff]
          %v938 = vld [vmem:[%s936 + $0x8] sm:$0xf]
          %v939 = vunpack.c.l.bf16 %v937
          %v940 = vunpack.c.h.bf16 %v937
          %v941 = vunpack.c.l.bf16 %v938
          %v942 = vadd.f32 %v939, %v905
          %v943 = vxor.u32 %v942, 2147483648
          %v944 = vmul.f32 %v943, 1.442695
          %v945 = vpow.pop %v944
          %v946 = vadd.f32 %v945, 1.0
          %v947 = vrcp.pop %v946
          %v948 = vmul.f32 %v946, %v947
          %v949 = vsub.f32 1.0, %v948
          %v950 = vmul.f32 %v947, %v949
          %v951 = vadd.f32 %v947, %v950
          %vm952 = vweird.f32 %v946
          %vm953 = vweird.f32 %v947
          %vm954 = vmor %vm952, %vm953
          %v955 = vsel %vm954, %v947, %v951
          %v956 = vand.u32 2147483647, %v946
          %vm957 = vcmp.eq.f32.partialorder %v956, 8.507059e+37
          %v958 = vand.u32 %v946, 2147483648
          %v959 = vor.u32 1.1754944e-38, %v958
          %v960 = vsel %vm957, %v959, %v955
          %v961 = vmul.f32 1.0, %v960
          %v962 = vadd.f32 %v931, %v430
          %v963 = vmul.f32 %v961, %v962
          %v964 = vadd.f32 %v941, %v963
          %v965 = vtanh.pop %v964
          %v966 = vadd.f32 %v940, %v918
          %v967 = vxor.u32 %v966, 2147483648
          %v968 = vmul.f32 %v967, 1.442695
          %v969 = vpow.pop %v968
          %v970 = vadd.f32 %v969, 1.0
          %v971 = vrcp.pop %v970
          %v972 = vmul.f32 %v970, %v971
          %v973 = vsub.f32 1.0, %v972
          %v974 = vmul.f32 %v971, %v973
          %v975 = vadd.f32 %v971, %v974
          %vm976 = vweird.f32 %v970
          %vm977 = vweird.f32 %v971
          %vm978 = vmor %vm976, %vm977
          %v979 = vsel %vm978, %v971, %v975
          %v980 = vand.u32 2147483647, %v970
          %vm981 = vcmp.eq.f32.partialorder %v980, 8.507059e+37
          %v982 = vand.u32 %v970, 2147483648
          %v983 = vor.u32 1.1754944e-38, %v982
          %v984 = vsel %vm981, %v983, %v979
          %v985 = vmul.f32 1.0, %v984
          %v986 = vsub.f32 1.0, %v985
          %v987 = vsub.f32 %v965, %v892
          %v988 = vmul.f32 %v986, %v987
          %v989 = vadd.f32 %v892, %v988
          %s990 = sadd.s32 %s375, %s893
          %v991 = vstv %s990
          %vm992 = vcmp.lt.s32.totalorder %v991, %v427
          %v993 = vsel %vm992, 1, 0
          %994 = vset.pattern.permute.xlu0 0
          %995 = vperm.xlu0 %994, %v993
          %v996 = vpop.permute.xlu0 %995
          %vm997 = vcmp.eq.s32.totalorder %v996, 1
          %v998 = vsel %vm997, %v989, 0.0
          %s999 = smul.u32 %s893, 8
          %s1000 = scalar_lea.vmem %s347, %s999 [#allocation9]
          %1001 = vst [vmem:[%s1000] sm:$0xff] %v998
          %v1002 = vsel %vm997, %v989, %v892
          %1003 = vst [vmem:[%s354] sm:$0xff] %v1002
        $region56: #{tpu_custom_call.1} parent=35 // pred_fallthru
          _
        %s1004 = sand.u32 %s174, 1
        %s1005 = scalar_lea.sflag [#allocation6], %s1004
        %s1006 = sand.u32 %s174, 1
        %s1007 = smul.addr %s1006, 32
        %s1008 = scalar_lea.vmem [#allocation9], %s1007
        %s1009 = sand.u32 %s200, 1
        %s1010 = scalar_lea.sflag [#allocation11], %s1009
        %s1011 = sand.u32 %s200, 1
        %s1012 = smul.addr %s1011, 8
        %s1013 = scalar_lea.vmem [#allocation10], %s1012
        // Predicated region
        $region57: #{tpu_custom_call.1} parent=35 // pred_check
          %p1014 = pneg %p184
        $region58: #{tpu_custom_call.1} parent=35 // pred_check_branch
          %1016 = sbr.rel (%p1014) target = $region60
        $region59: #{tpu_custom_call.1} parent=35 // pred_region
          %s1017 = ssub.s32 1, %s36
          %s1018 = smul.u32 %s35, %s1017
          %s1019 = ssub.s32 1, %s35
          %s1020 = smul.u32 %s1019, %s36
          %s1021 = sadd.s32 %s1018, %s1020
          %s1022 = smul.u32 4, %s1021
          %1024 = vsyncadd %s1005, 0
          %s1025 = smul.addr %s35, 8
          %s1026 = sadd.s32 %s1022, %s1025
          %s1027 = smul.addr %s1026, 8
          %s1028 = scalar_lea.hbm %s5, %s1027
          %s1029 = sshll.u32 %s1008, 4
          %s1030 = int_to_ptr.vmem [resolvable:$true] %s1029
          %s1031 = sshll.u32 %s1028, 4
          %s1032 = int_to_ptr.hbm [resolvable:$true] %s1031
          %1037 = dma.vmem_to_hbm [thread:$0]  %s1030, 512, %s1032, %s1005, 128, 128, 8
        $region60: #{tpu_custom_call.1} parent=35 // pred_fallthru
          _
        // Predicated region
        $region61: #{tpu_custom_call.1} parent=35 // pred_check
          %p1038 = pneg %p210
        $region62: #{tpu_custom_call.1} parent=35 // pred_check_branch
          %1040 = sbr.rel (%p1038) target = $region64
        $region63: #{tpu_custom_call.1} parent=35 // pred_region
          %1042 = vsyncadd %s1010, 0
          %s1043 = smul.addr %s35, 8
          %s1044 = scalar_lea.hbm %s6, %s1043
          %s1046 = sshll.u32 %s1013, 4
          %s1047 = int_to_ptr.vmem [resolvable:$true] %s1046
          %s1048 = sshll.u32 %s1044, 4
          %s1049 = int_to_ptr.hbm [resolvable:$true] %s1048
          %1051 = dma.vmem_to_hbm [thread:$0]  %s1047, 128, %s1049, %s1010
        $region64: #{tpu_custom_call.1} parent=35 // pred_fallthru
          _
      $region36: #{tpu_custom_call.1} parent=5 // pred_fallthru
        _
      %p1052 = scmp.le.s32.totalorder 2, %s26
      // Predicated region
      $region65: #{tpu_custom_call.1} parent=5 // pred_check
        %p1053 = pneg %p1052
      $region66: #{tpu_custom_call.1} parent=5 // pred_check_branch
        %1055 = sbr.rel (%p1053) target = $region68
      $region67: #{tpu_custom_call.1} parent=5 // pred_region
        %s1056 = ssub.s32 %s26, 2
        // Predicated region
        $region69: #{tpu_custom_call.1} parent=67 // pred_check
          %p1057 = pneg %p190
        $region70: #{tpu_custom_call.1} parent=67 // pred_check_branch
          %1059 = sbr.rel (%p1057) target = $region72
        $region71: #{tpu_custom_call.1} parent=67 // pred_region
          %s1060 = sand.u32 %s175, 1
          %s1061 = scalar_lea.sflag [#allocation6], %s1060
          %s1062 = sand.u32 %s175, 1
          %s1063 = smul.addr %s1062, 32
          %s1064 = scalar_lea.vmem [#allocation9], %s1063
          %1066 = dma.done %s1061, 512
        $region72: #{tpu_custom_call.1} parent=67 // pred_fallthru
          _
        // Predicated region
        $region73: #{tpu_custom_call.1} parent=67 // pred_check
          %p1067 = pneg %p216
        $region74: #{tpu_custom_call.1} parent=67 // pred_check_branch
          %1069 = sbr.rel (%p1067) target = $region76
        $region75: #{tpu_custom_call.1} parent=67 // pred_region
          %s1070 = sand.u32 %s201, 1
          %s1071 = scalar_lea.sflag [#allocation11], %s1070
          %s1072 = sand.u32 %s201, 1
          %s1073 = smul.addr %s1072, 8
          %s1074 = scalar_lea.vmem [#allocation10], %s1073
          %1076 = dma.done %s1071, 128
        $region76: #{tpu_custom_call.1} parent=67 // pred_fallthru
          _
      $region68: #{tpu_custom_call.1} parent=5 // pred_fallthru
        _
    $region6: #{tpu_custom_call.1} parent=1 // loop_footer
      %s30 = sadd.s32 1, %s26
    $region7: #{tpu_custom_call.1} parent=1 // loop_footer_branch
      %25 = sbr.rel target = $region3
    $region8: #{tpu_custom_call.1} parent=1 // loop_exit
      _
    %1077 = vsyncpa [#allocation5], 1
    %s1078 = scalar_lea.sflag [#allocation5], 1
    %1079 = vsyncpa %s1078, 1
    %1080 = vsyncpa [#allocation8], 1
    %s1081 = scalar_lea.sflag [#allocation8], 1
    %1082 = vsyncpa %s1081, 1
    %1083 = vsyncpa [#allocation6], 1
    %s1084 = scalar_lea.sflag [#allocation6], 1
    %1085 = vsyncpa %s1084, 1
    %1086 = vsyncpa [#allocation11], 1
    %s1087 = scalar_lea.sflag [#allocation11], 1
    %1088 = vsyncpa %s1087, 1

</llo_original>
